<compile_context>
chip_gen: v5e
topology: v5e:2x2
jax: 0.10.0
libtpu: 0.0.40
codegen_flags: <defaults>
</compile_context>

<pallas_src>
import jax
import jax.numpy as jnp
from jax.experimental import pallas as pl
from jax.experimental.pallas import tpu as pltpu

EPSILON = 1e-5


def _round_up(x, m):
    return (x + m - 1) // m * m


def _cdiv(a, b):
    return -(-a // b)


# ----------------------------------------------------------------------------
# Pallas kernel: out = x * keep + relu(x @ W + b) * split
# The matmul is skipped for row tiles whose scalar-prefetched flag is 0
# (no split tokens in that tile) -> pure copy/scale path for those tiles.
# ----------------------------------------------------------------------------
def _sgdt_reassemble_kernel(flags_ref, x_ref, w_ref, b_ref, m_ref, o_ref):
    i = pl.program_id(0)

    @pl.when(flags_ref[i] != 0)
    def _():
        x = x_ref[...]                    # (rt, C) f32
        keep = m_ref[:, 0:1]              # (rt, 1) f32
        split = m_ref[:, 1:2]             # (rt, 1) f32
        # bf16 MXU inputs (native on v6e/v7x), f32 accumulation.  This deviates
        # from PyTorch's f32 nn.Linear by ~1e-2 abs; swap to f32 weights if
        # bit-level parity is needed — the kernel is HBM-bound, so it's free.
        z = jnp.dot(x.astype(jnp.bfloat16), w_ref[...],
                    preferred_element_type=jnp.float32)
        z = jnp.maximum(z + b_ref[...], 0.0)          # TokenSplit: Linear + ReLU
        o_ref[...] = (x * keep + z * split).astype(o_ref.dtype)

    @pl.when(flags_ref[i] == 0)
    def _():
        o_ref[...] = (x_ref[...] * m_ref[:, 0:1]).astype(o_ref.dtype)


def sgdt_reassemble_tokens(x2d, w, b, keep, split, *, row_tile=1024,
                           out_dtype=None):
    """x2d: (R, C) tokens; w: (C, C) weight already transposed so that
    z = x @ w + b == torch's x @ weight.T + bias (cast to bf16 here);
    b: (C,) f32; keep/split: (R,) f32 masks.  Returns (R, C) in out_dtype
    (defaults to x2d.dtype)."""
    R, C = x2d.shape
    out_dtype = x2d.dtype if out_dtype is None else out_dtype

    # ---- adaptive row tiling, no padding of the hot tensor ----
    # rt only needs to be a multiple of 8 (sublane); the C axis uses full-dim
    # blocks.  n_tiles is kept even when there is enough work so the parallel
    # grid axis balances across the two v7x TensorCores.
    row_tile = _round_up(max(8, row_tile), 8)
    n_tiles = max(1, _cdiv(R, row_tile))
    if n_tiles % 2 == 1 and R >= 256:
        n_tiles += 1
    rt = _round_up(_cdiv(R, n_tiles), 8)
    n_tiles = _cdiv(R, rt)

    # Pack keep/split into one (R, 2) stream -> a single (tiny) mask DMA per step.
    masks2d = jnp.stack([keep, split], axis=-1).astype(jnp.float32)

    # Per-tile "any split token" flag, scalar-prefetched into SMEM.  Computed
    # from an explicitly padded copy of the tiny split vector so the last
    # (partial) tile's skip flag is never derived from OOB garbage.
    split_pad = jnp.pad(split.astype(jnp.float32), (0, n_tiles * rt - R))
    flags = (jnp.max(split_pad.reshape(n_tiles, rt), axis=1) > 0).astype(jnp.int32)

    w_bf16 = w.astype(jnp.bfloat16)               # (C, C), resident in VMEM
    b2d = b.reshape(1, C).astype(jnp.float32)     # (1, C), resident in VMEM

    # VMEM budget at rt<=1024, C=256 (f32 x/out double-buffered, bf16 W):
    # ~4.3 MiB — well under the scoped default on v5e/v6e (16/32 MiB) and
    # v7x (32 MiB scoped / 64 MiB physical).
    out = pl.pallas_call(
        _sgdt_reassemble_kernel,
        out_shape=jax.ShapeDtypeStruct((R, C), out_dtype),
        grid_spec=pltpu.PrefetchScalarGridSpec(
            num_scalar_prefetch=1,
            grid=(n_tiles,),
            in_specs=[
                pl.BlockSpec((rt, C), lambda i, flags: (i, 0)),   # x rows
                pl.BlockSpec((C, C), lambda i, flags: (0, 0)),    # weight (resident)
                pl.BlockSpec((1, C), lambda i, flags: (0, 0)),    # bias (resident)
                pl.BlockSpec((rt, 2), lambda i, flags: (i, 0)),   # packed keep/split
            ],
            out_specs=pl.BlockSpec((rt, C), lambda i, flags: (i, 0)),
        ),
        compiler_params=pltpu.CompilerParams(
            # Independent row tiles -> shardable across the two TensorCores on
            # v7x; a no-op on single-TC v5e/v6e.
            dimension_semantics=("parallel",)),
    )(flags, x2d, w_bf16, b2d, masks2d)

    return out


# ----------------------------------------------------------------------------
# SGDT_module equivalent (gt_only_exp path)
# ----------------------------------------------------------------------------
class SGDTModule:
    def __init__(self, embed_dim, key,
                 token_scoring_discard_split_criterion="gt_only_exp"):
        assert "gt_only_exp" in token_scoring_discard_split_criterion
        self.embed_dim = embed_dim
        self.criterion = token_scoring_discard_split_criterion
        # TokenSplit(embed_dim, expand=1): nn.Linear(C, C) + ReLU.
        # Deterministic init matching torch.nn.Linear default (uniform +-1/sqrt(C)).
        bound = 1.0 / (embed_dim ** 0.5)
        k1, k2 = jax.random.split(key)
        # Weight stored already transposed (kernel computes x @ w + b) and in
        # bf16 (native MXU dtype; the resident weight is tiny either way).
        self.w = jax.random.uniform(
            k1, (embed_dim, embed_dim), jnp.float32, -bound, bound
        ).astype(jnp.bfloat16)
        self.b = jax.random.uniform(k2, (embed_dim,), jnp.float32, -bound, bound)

    @staticmethod
    def _valid_token_mask(x, mask):
        N, B, _ = x.shape
        if mask is None:
            return jnp.ones((N, B), dtype=bool)
        return ~jnp.transpose(mask, (1, 0))          # (B, N) -> (N, B)

    def __call__(self, x, mask=None, sgdt_targets=None):
        """x: (N, B, C) float32; mask: (B, N) bool (True = padding);
        sgdt_targets: {'fg_gt': (N, B), 'scale_gt': (N, B)} floats."""
        N, B, C = x.shape
        fg_gt = sgdt_targets["fg_gt"].astype(jnp.float32)
        scale_gt = sgdt_targets["scale_gt"].astype(jnp.float32)

        valid = self._valid_token_mask(x, mask)                 # (N, B) bool
        valid_f = valid.astype(jnp.float32)
        invalid = ~valid

        # GT-based split / discard decisions.
        tokens_to_split_original = (scale_gt > 0).astype(jnp.float32) * valid_f
        tokens_to_discard_original = (1.0 - fg_gt) * valid_f
        # Remove overlap (discard loses, as in the reference).
        overlap = (tokens_to_discard_original * tokens_to_split_original) > 0
        tokens_to_discard_original = jnp.where(overlap, 0.0,
                                               tokens_to_discard_original)

        # _pred_processing: if a batch element would lose every token, keep token 0.
        all_remove = jnp.all(invalid | tokens_to_discard_original.astype(bool),
                             axis=0)                             # (B,)
        tokens_to_discard_original = tokens_to_discard_original.at[0, :].set(
            jnp.where(all_remove, 0.0, tokens_to_discard_original[0, :]))

        tokens_to_discard = tokens_to_discard_original.astype(bool)
        tokens_small_obj = tokens_to_split_original.astype(bool)

        # keep_mask = 1 - (discard_orig * discard + split_orig * split)
        keep_mask = 1.0 - (tokens_to_discard_original * tokens_to_discard.astype(jnp.float32)
                           + tokens_to_split_original * tokens_small_obj.astype(jnp.float32))
        split_mask = tokens_small_obj.astype(jnp.float32)

        # ---- hot path: one Pallas kernel over (N*B, C) rows ----
        x2d = x.reshape(N * B, C)
        x_new2d = sgdt_reassemble_tokens(
            x2d, self.w, self.b,
            keep_mask.reshape(N * B), split_mask.reshape(N * B))
        x_new = x_new2d.reshape(N, B, C)

        # _generate_src_key_padding_mask
        src_mask_reclaimed = jnp.transpose(invalid | tokens_to_discard, (1, 0))
        # TODO(synk): the per-batch `assert not src_mask.all()` runtime check is a
        # host-side assert in PyTorch; not expressible as a static check here.

        return {
            "x": x_new,
            "src_mask_reclaimed": src_mask_reclaimed,
            "tokens_small_obj": tokens_small_obj,
            "tokens_to_discard": tokens_to_discard,
            "valid_tokens": valid_f,
            "valid_tokens_original": valid_f,
            "increase_resolution": False,
            "tokens_to_discard_original": tokens_to_discard_original,
            "tokens_to_split_original": tokens_to_split_original,
            "fg_score": fg_gt,
            "small_scale_score": scale_gt,
            "significance_score": scale_gt,
        }


# ----------------------------------------------------------------------------
if __name__ == "__main__":
    key = jax.random.PRNGKey(0)
    k_x, k_fg, k_scale, k_w = jax.random.split(key, 4)

    # DN-DETR-like (small) shapes: embed_dim 256 keeps the lane axis dense,
    # N*B = 600 is deliberately NOT a multiple of the row tile (tests the
    # partial-last-block path), and the 2-tile grid balances both v7x cores.
    N, B, C = 300, 2, 256                   # tokens, batch, embed_dim
    x = jax.random.normal(k_x, (N, B, C), dtype=jnp.float32)

    # padding mask (B, N): True = padded; pad last 44 tokens of batch 1
    mask = jnp.zeros((B, N), dtype=bool).at[1, -44:].set(True)

    # GT targets (N, B)
    fg_gt = (jax.random.uniform(k_fg, (N, B)) > 0.5).astype(jnp.float32)
    scale_gt = jnp.where(jax.random.uniform(k_scale, (N, B)) > 0.7,
                         jax.random.uniform(k_scale, (N, B)), 0.0)
    # only fg tokens can be "small objects"
    scale_gt = scale_gt * fg_gt
    # make the second row tile (flattened rows >= 304, i.e. n >= 152) split-free
    # so the kernel's matmul-skip path is exercised
    scale_gt = scale_gt * (jnp.arange(N)[:, None] < 152).astype(jnp.float32)
    sgdt_targets = {"fg_gt": fg_gt, "scale_gt": scale_gt}

    module = SGDTModule(embed_dim=C, key=k_w,
                        token_scoring_discard_split_criterion="gt_only_exp")
    out = module(x, mask=mask, sgdt_targets=sgdt_targets)
    x_new = jax.block_until_ready(out["x"])

    # ---- plain-JAX reference for the hot path ----
    valid_f = (~mask.T).astype(jnp.float32)
    split_o = (scale_gt > 0).astype(jnp.float32) * valid_f
    disc_o = (1.0 - fg_gt) * valid_f
    disc_o = jnp.where((disc_o * split_o) > 0, 0.0, disc_o)
    all_rm = jnp.all(mask.T | disc_o.astype(bool), axis=0)
    disc_o = disc_o.at[0, :].set(jnp.where(all_rm, 0.0, disc_o[0, :]))
    keep = 1.0 - (disc_o + split_o)

    # same bf16-input / f32-accumulate math as the kernel
    z_bf16 = jnp.maximum(
        jnp.einsum("nbc,cd->nbd", x.astype(jnp.bfloat16), module.w,
                   preferred_element_type=jnp.float32) + module.b, 0.0)
    x_ref = x * keep[..., None] + z_bf16 * split_o[..., None]
    assert jnp.allclose(x_new, x_ref, atol=1e-2, rtol=1e-2), "mismatch vs bf16 ref"

    # loose check against pure-f32 math (bf16 matmul inputs cost ~1e-3 abs err)
    z_f32 = jnp.maximum(
        jnp.einsum("nbc,cd->nbd", x, module.w.astype(jnp.float32)) + module.b, 0.0)
    x_ref32 = x * keep[..., None] + z_f32 * split_o[..., None]
    assert jnp.allclose(x_new, x_ref32, atol=5e-2, rtol=5e-2), "mismatch vs f32 ref"

    assert x_new.shape == (N, B, C)
    assert x_new.dtype == x.dtype
    assert out["src_mask_reclaimed"].shape == (B, N)

    print("KERNEL_OK")
</pallas_src>

<mosaic_0001>
module attributes {stable_mosaic.version = 11 : i64} {
  func.func @_sgdt_reassemble_kernel(%arg0: i32, %arg1: memref<2xi32, #tpu.memory_space<smem>>, %arg2: memref<304x256xf32, #tpu.memory_space<vmem>>, %arg3: memref<256x256xbf16, #tpu.memory_space<vmem>>, %arg4: memref<1x256xf32, #tpu.memory_space<vmem>>, %arg5: memref<304x2xf32, #tpu.memory_space<vmem>>, %arg6: memref<304x256xf32, #tpu.memory_space<vmem>>) attributes {dimension_semantics = [#tpu.dimension_semantics<parallel>], iteration_bounds = array<i64: 2>, scalar_prefetch = 1 : i64, scratch_operands = 0 : i64, tpu.core_type = #tpu.core_type<tc>, window_params = [{transform_indices = @transform_0, window_bounds = array<i64: 304, 256>}, {pipeline_mode = #tpu.pipeline_mode<synchronous>, transform_indices = @transform_1, window_bounds = array<i64: 256, 256>}, {pipeline_mode = #tpu.pipeline_mode<synchronous>, transform_indices = @transform_2, window_bounds = array<i64: 1, 256>}, {transform_indices = @transform_3, window_bounds = array<i64: 304, 2>}, {transform_indices = @transform_4, window_bounds = array<i64: 304, 256>}]} {
    %0 = arith.index_cast %arg0 : i32 to index
    %1 = memref.load %arg1[%0] : memref<2xi32, #tpu.memory_space<smem>>
    %c0_i32 = arith.constant 0 : i32
    %2 = arith.cmpi ne, %1, %c0_i32 : i32
    %3 = arith.extui %2 : i1 to i32
    %c0_i32_0 = arith.constant 0 : i32
    %4 = arith.cmpi ne, %3, %c0_i32_0 : i32
    scf.if %4 {
      %c0 = arith.constant 0 : index
      %c0_3 = arith.constant 0 : index
      %10 = vector.load %arg2[%c0, %c0_3] : memref<304x256xf32, #tpu.memory_space<vmem>>, vector<304x256xf32>
      %c0_4 = arith.constant 0 : index
      %c0_5 = arith.constant 0 : index
      %11 = vector.load %arg5[%c0_4, %c0_5] : memref<304x2xf32, #tpu.memory_space<vmem>>, vector<304x1xf32>
      %c0_6 = arith.constant 0 : index
      %c1 = arith.constant 1 : index
      %12 = vector.load %arg5[%c0_6, %c1] : memref<304x2xf32, #tpu.memory_space<vmem>>, vector<304x1xf32>
      %13 = arith.truncf %10 : vector<304x256xf32> to vector<304x256xbf16>
      %c0_7 = arith.constant 0 : index
      %c0_8 = arith.constant 0 : index
      %14 = vector.load %arg3[%c0_7, %c0_8] : memref<256x256xbf16, #tpu.memory_space<vmem>>, vector<256x256xbf16>
      %cst = arith.constant dense<0.000000e+00> : vector<304x256xf32>
      %15 = tpu.matmul %13, %14, %cst {dimension_numbers = #tpu.dot_dimension_numbers<[1], [0], [0], [1], [0, 0, 1, 1], [], []>} : vector<304x256xbf16>, vector<256x256xbf16>, vector<304x256xf32> -> vector<304x256xf32>
      %c0_9 = arith.constant 0 : index
      %c0_10 = arith.constant 0 : index
      %16 = vector.load %arg4[%c0_9, %c0_10] : memref<1x256xf32, #tpu.memory_space<vmem>>, vector<1x256xf32>
      %17 = vector.broadcast %16 : vector<1x256xf32> to vector<304x256xf32>
      %18 = arith.addf %15, %17 : vector<304x256xf32>
      %cst_11 = arith.constant 0.000000e+00 : f32
      %19 = vector.broadcast %cst_11 : f32 to vector<304x256xf32>
      %20 = arith.maximumf %18, %19 : vector<304x256xf32>
      %21 = vector.broadcast %11 : vector<304x1xf32> to vector<304x256xf32>
      %22 = arith.mulf %10, %21 : vector<304x256xf32>
      %23 = vector.broadcast %12 : vector<304x1xf32> to vector<304x256xf32>
      %24 = arith.mulf %20, %23 : vector<304x256xf32>
      %25 = arith.addf %22, %24 : vector<304x256xf32>
      %c0_12 = arith.constant 0 : index
      %c0_13 = arith.constant 0 : index
      %26 = vector.load %arg6[%c0_12, %c0_13] : memref<304x256xf32, #tpu.memory_space<vmem>>, vector<304x256xf32>
      tpu.vector_store %arg6[%c0_12, %c0_13], %25 {strides = array<i32>} : memref<304x256xf32, #tpu.memory_space<vmem>>, vector<304x256xf32>,
    } else {
    }
    %5 = arith.index_cast %arg0 : i32 to index
    %6 = memref.load %arg1[%5] : memref<2xi32, #tpu.memory_space<smem>>
    %c0_i32_1 = arith.constant 0 : i32
    %7 = arith.cmpi eq, %6, %c0_i32_1 : i32
    %8 = arith.extui %7 : i1 to i32
    %c0_i32_2 = arith.constant 0 : i32
    %9 = arith.cmpi ne, %8, %c0_i32_2 : i32
    scf.if %9 {
      %c0 = arith.constant 0 : index
      %c0_3 = arith.constant 0 : index
      %10 = vector.load %arg2[%c0, %c0_3] : memref<304x256xf32, #tpu.memory_space<vmem>>, vector<304x256xf32>
      %c0_4 = arith.constant 0 : index
      %c0_5 = arith.constant 0 : index
      %11 = vector.load %arg5[%c0_4, %c0_5] : memref<304x2xf32, #tpu.memory_space<vmem>>, vector<304x1xf32>
      %12 = vector.broadcast %11 : vector<304x1xf32> to vector<304x256xf32>
      %13 = arith.mulf %10, %12 : vector<304x256xf32>
      %c0_6 = arith.constant 0 : index
      %c0_7 = arith.constant 0 : index
      %14 = vector.load %arg6[%c0_6, %c0_7] : memref<304x256xf32, #tpu.memory_space<vmem>>, vector<304x256xf32>
      tpu.vector_store %arg6[%c0_6, %c0_7], %13 {strides = array<i32>} : memref<304x256xf32, #tpu.memory_space<vmem>>, vector<304x256xf32>,
    } else {
    }
    return
  }
  func.func @transform_0(%arg0: i32, %arg1: memref<2xi32, #tpu.memory_space<smem>>) -> (i32, i32) {
    %c0_i32 = arith.constant 0 : i32
    %c0_i32_0 = arith.constant 0 : i32
    return %arg0, %c0_i32 : i32, i32
  }
  func.func @transform_1(%arg0: i32, %arg1: memref<2xi32, #tpu.memory_space<smem>>) -> (i32, i32) {
    %c0_i32 = arith.constant 0 : i32
    %c0_i32_0 = arith.constant 0 : i32
    %c0_i32_1 = arith.constant 0 : i32
    return %c0_i32, %c0_i32_0 : i32, i32
  }
  func.func @transform_2(%arg0: i32, %arg1: memref<2xi32, #tpu.memory_space<smem>>) -> (i32, i32) {
    %c0_i32 = arith.constant 0 : i32
    %c0_i32_0 = arith.constant 0 : i32
    %c0_i32_1 = arith.constant 0 : i32
    return %c0_i32, %c0_i32_0 : i32, i32
  }
  func.func @transform_3(%arg0: i32, %arg1: memref<2xi32, #tpu.memory_space<smem>>) -> (i32, i32) {
    %c0_i32 = arith.constant 0 : i32
    %c0_i32_0 = arith.constant 0 : i32
    return %arg0, %c0_i32 : i32, i32
  }
  func.func @transform_4(%arg0: i32, %arg1: memref<2xi32, #tpu.memory_space<smem>>) -> (i32, i32) {
    %c0_i32 = arith.constant 0 : i32
    %c0_i32_0 = arith.constant 0 : i32
    return %arg0, %c0_i32 : i32, i32
  }
}

</mosaic_0001>

<llo_original>
// kernel: tpu_custom_call.1
$region0: #{tpu_custom_call.1}
  #allocation0 [shape = 'u32[]', space=smem, size = 0x4, offset = 0x4, fixed_abs, tag = 'smem constant byte address 0x4 - core index']
  #allocation1 [shape = 'u32[72,128]{1,0:T(1,128)}', space=vmem, size = 0x9000, scoped, tag = 'internal scratch']
  #allocation2 [shape = 's32[1]{0}', space=sflag, size = 0x4, scoped, tag = 'scoped memory for tpu_custom_call.1']
  #allocation3 [shape = 'u8[512]{0}', space=smem, size = 0x200, scoped, tag = 'prefetched SMEM operand 0']
  %s0 = inlined_call_operand.vmem [shape: s32[2], index: 0, kind: input, shape index: {}]
  %s1 = inlined_call_operand.hbm [shape: f32[600,256], index: 1, kind: input, shape index: {}]
  %s2 = inlined_call_operand.vmem [shape: bf16[256,256], index: 2, kind: input, shape index: {}]
  %s3 = inlined_call_operand.vmem [shape: f32[1,256], index: 3, kind: input, shape index: {}]
  %s4 = inlined_call_operand.vmem [shape: f32[600,2], index: 4, kind: input, shape index: {}]
  %s5 = inlined_call_operand.hbm [shape: f32[600,256], index: 5, kind: output, shape index: {}]
  %s6 = sld [smem:[#allocation0]]
  $region61: #{tpu_custom_call.1} parent=0
    _
  %s8 = ssub.s32 1, %s6
  %s9 = scalar_select 0, %s8, %s6
  %s11 = sshll.u32 %s0, 4
  %s12 = int_to_ptr.vmem [resolvable:$true] %s11
  %14 = dma.vmem_to_smem %s12, 16, [#allocation3], [#allocation2]
  %16 = dma.done [#allocation2], 16
  %17 = sfence
  $region1: #{tpu_custom_call.1} parent=0
    #allocation4 [shape = 'u8[622592]{0}', space=vmem, size = 0x98000, scoped, tag = 'input window, operand 1']
    #allocation5 [shape = 's32[2]{0}', space=sflag, size = 0x8, scoped, tag = 'scoped memory for tpu_custom_call.1']
    #allocation6 [shape = 's32[2]{0}', space=sflag, size = 0x8, scoped, tag = 'scoped memory for tpu_custom_call.1']
    #allocation7 [shape = 'u8[622592]{0}', space=vmem, size = 0x98000, scoped, tag = 'output window, operand 0']
    %18 = vsyncpa [#allocation5], 0
    %s19 = scalar_lea.sflag [#allocation5], 1
    %20 = vsyncpa %s19, 0
    %21 = vsyncpa [#allocation6], 0
    %s22 = scalar_lea.sflag [#allocation6], 1
    %23 = vsyncpa %s22, 0
    loop: start=0, step=1, limit=4
    $region2: #{tpu_custom_call.1} parent=1 // loop_pre_header
      _
    $region3: #{tpu_custom_call.1} parent=1 // loop_header
      %s25 = sphi 0, %s29
      %p26 = scmp.ge.s32.totalorder %s25, 4
      %s35 = sphi 0, %s37
      %s38 = sphi 0, %s35
      %s39 = sphi 0, %s38
      %s55 = sphi 0, %s39
      %s59 = sphi 0, %s59
      %s61 = sphi 0, %s59
      %s62 = sphi 0, %s61
      %s76 = sphi 0, %s62
      %s80 = sphi 0, %s80
      %s82 = sphi 0, %s80
      %s83 = sphi 0, %s82
      %s97 = sphi 0, %s83
      %s103 = sphi 0, %s105
      %s106 = sphi 0, %s103
      %s107 = sphi 0, %s106
      %s123 = sphi 0, %s107
      %s129 = sphi 0, %s131
      %s132 = sphi 0, %s129
      %s133 = sphi 0, %s132
      %s149 = sphi 0, %s133
    $region4: #{tpu_custom_call.1} parent=1 // loop_header_branch
      %28 = sbr.rel (%p26) target = $region8
    $region5: #{tpu_custom_call.1} parent=1 // loop_body
      %s30 = ssub.s32 %s25, 1
      %s31 = ssub.s32 %s25, 2
      %s32 = sadd.s32 %s25, 1
      %s33 = ssub.s32 %s25, %s32
      %p34 = scmp.eq.s32.totalorder %s33, 0
      %s36 = sadd.s32 %s35, 1
      %s37 = scalar_select %p34, %s35, %s36
      %p40 = pneg %p34
      %p41 = scmp.eq.s32.totalorder %s25, 1
      %p42 = por %p40, %p41
      %p43 = scmp.ne.s32.totalorder %s35, %s38
      %p44 = scmp.eq.s32.totalorder %s25, 0
      %p45 = por %p43, %p44
      %p46 = scmp.ne.s32.totalorder %s35, %s38
      %p47 = scmp.eq.s32.totalorder %s30, 1
      %p48 = por %p46, %p47
      %p49 = scmp.ne.s32.totalorder %s38, %s39
      %p50 = scmp.eq.s32.totalorder %s30, 0
      %p51 = por %p49, %p50
      %p52 = scmp.ne.s32.totalorder %s38, %s39
      %p53 = scmp.eq.s32.totalorder %s31, 1
      %p54 = por %p52, %p53
      %p56 = scmp.ne.s32.totalorder %s39, %s55
      %p57 = scmp.eq.s32.totalorder %s31, 0
      %p58 = por %p56, %p57
      %s60 = sadd.s32 %s59, 1
      %p63 = scmp.eq.s32.totalorder %s25, 1
      %p64 = scmp.ne.s32.totalorder %s59, %s61
      %p65 = scmp.eq.s32.totalorder %s25, 0
      %p66 = por %p64, %p65
      %p67 = scmp.ne.s32.totalorder %s59, %s61
      %p68 = scmp.eq.s32.totalorder %s30, 1
      %p69 = por %p67, %p68
      %p70 = scmp.ne.s32.totalorder %s61, %s62
      %p71 = scmp.eq.s32.totalorder %s30, 0
      %p72 = por %p70, %p71
      %p73 = scmp.ne.s32.totalorder %s61, %s62
      %p74 = scmp.eq.s32.totalorder %s31, 1
      %p75 = por %p73, %p74
      %p77 = scmp.ne.s32.totalorder %s62, %s76
      %p78 = scmp.eq.s32.totalorder %s31, 0
      %p79 = por %p77, %p78
      %s81 = sadd.s32 %s80, 1
      %p84 = scmp.eq.s32.totalorder %s25, 1
      %p85 = scmp.ne.s32.totalorder %s80, %s82
      %p86 = scmp.eq.s32.totalorder %s25, 0
      %p87 = por %p85, %p86
      %p88 = scmp.ne.s32.totalorder %s80, %s82
      %p89 = scmp.eq.s32.totalorder %s30, 1
      %p90 = por %p88, %p89
      %p91 = scmp.ne.s32.totalorder %s82, %s83
      %p92 = scmp.eq.s32.totalorder %s30, 0
      %p93 = por %p91, %p92
      %p94 = scmp.ne.s32.totalorder %s82, %s83
      %p95 = scmp.eq.s32.totalorder %s31, 1
      %p96 = por %p94, %p95
      %p98 = scmp.ne.s32.totalorder %s83, %s97
      %p99 = scmp.eq.s32.totalorder %s31, 0
      %p100 = por %p98, %p99
      %s101 = ssub.s32 %s25, %s32
      %p102 = scmp.eq.s32.totalorder %s101, 0
      %s104 = sadd.s32 %s103, 1
      %s105 = scalar_select %p102, %s103, %s104
      %p108 = pneg %p102
      %p109 = scmp.eq.s32.totalorder %s25, 1
      %p110 = por %p108, %p109
      %p111 = scmp.ne.s32.totalorder %s103, %s106
      %p112 = scmp.eq.s32.totalorder %s25, 0
      %p113 = por %p111, %p112
      %p114 = scmp.ne.s32.totalorder %s103, %s106
      %p115 = scmp.eq.s32.totalorder %s30, 1
      %p116 = por %p114, %p115
      %p117 = scmp.ne.s32.totalorder %s106, %s107
      %p118 = scmp.eq.s32.totalorder %s30, 0
      %p119 = por %p117, %p118
      %p120 = scmp.ne.s32.totalorder %s106, %s107
      %p121 = scmp.eq.s32.totalorder %s31, 1
      %p122 = por %p120, %p121
      %p124 = scmp.ne.s32.totalorder %s107, %s123
      %p125 = scmp.eq.s32.totalorder %s31, 0
      %p126 = por %p124, %p125
      %s127 = ssub.s32 %s25, %s32
      %p128 = scmp.eq.s32.totalorder %s127, 0
      %s130 = sadd.s32 %s129, 1
      %s131 = scalar_select %p128, %s129, %s130
      %p134 = pneg %p128
      %p135 = scmp.eq.s32.totalorder %s25, 1
      %p136 = por %p134, %p135
      %p137 = scmp.ne.s32.totalorder %s129, %s132
      %p138 = scmp.eq.s32.totalorder %s25, 0
      %p139 = por %p137, %p138
      %p140 = scmp.ne.s32.totalorder %s129, %s132
      %p141 = scmp.eq.s32.totalorder %s30, 1
      %p142 = por %p140, %p141
      %p143 = scmp.ne.s32.totalorder %s132, %s133
      %p144 = scmp.eq.s32.totalorder %s30, 0
      %p145 = por %p143, %p144
      %p146 = scmp.ne.s32.totalorder %s132, %s133
      %p147 = scmp.eq.s32.totalorder %s31, 1
      %p148 = por %p146, %p147
      %p150 = scmp.ne.s32.totalorder %s133, %s149
      %p151 = scmp.eq.s32.totalorder %s31, 0
      %p152 = por %p150, %p151
      %p153 = scmp.le.s32.totalorder 1, %s25
      %p154 = scmp.lt.s32.totalorder %s25, 3
      %p155 = pnand %p153, %p154
      %p156 = pneg %p155
      // Predicated region
      $region9: #{tpu_custom_call.1} parent=5 // pred_check
        _
      $region10: #{tpu_custom_call.1} parent=5 // pred_check_branch
        %158 = sbr.rel (%p155) target = $region12
      $region11: #{tpu_custom_call.1} parent=5 // pred_region
        %s159 = ssub.s32 %s25, 1
        // Predicated region
        $region13: #{tpu_custom_call.1} parent=11 // pred_check
          %p160 = pneg %p72
        $region14: #{tpu_custom_call.1} parent=11 // pred_check_branch
          %162 = sbr.rel (%p160) target = $region16
        $region15: #{tpu_custom_call.1} parent=11 // pred_region
          _
        $region16: #{tpu_custom_call.1} parent=11 // pred_fallthru
          _
        // Predicated region
        $region17: #{tpu_custom_call.1} parent=11 // pred_check
          %p163 = pneg %p93
        $region18: #{tpu_custom_call.1} parent=11 // pred_check_branch
          %165 = sbr.rel (%p163) target = $region20
        $region19: #{tpu_custom_call.1} parent=11 // pred_region
          _
        $region20: #{tpu_custom_call.1} parent=11 // pred_fallthru
          _
      $region12: #{tpu_custom_call.1} parent=5 // pred_fallthru
        _
      %p166 = scmp.lt.s32.totalorder %s25, 2
      // Predicated region
      $region21: #{tpu_custom_call.1} parent=5 // pred_check
        %p167 = pneg %p166
      $region22: #{tpu_custom_call.1} parent=5 // pred_check_branch
        %169 = sbr.rel (%p167) target = $region24
      $region23: #{tpu_custom_call.1} parent=5 // pred_region
        // Predicated region
        $region25: #{tpu_custom_call.1} parent=23 // pred_check
          %p170 = pneg %p45
        $region26: #{tpu_custom_call.1} parent=23 // pred_check_branch
          %172 = sbr.rel (%p170) target = $region28
        $region27: #{tpu_custom_call.1} parent=23 // pred_region
          %s173 = sand.u32 %s35, 1
          %s174 = scalar_lea.sflag [#allocation5], %s173
          %s175 = sand.u32 %s35, 1
          %s176 = smul.addr %s175, 608
          %s177 = scalar_lea.vmem [#allocation4], %s176
          %s178 = smul.u32 38, %s25
          %s179 = ssub.s32 75, %s178
          %p180 = scmp.lt.s32.totalorder %s179, 38
          %s181 = scalar_select %p180, %s179, 38
          %s182 = smul.u32 8, %s181
          %s183 = smul.u32 %s182, 2
          %s184 = ssub.s32 608, %s183
          %s185 = sshll.u32 %s184, 4
          %186 = vsyncadd %s174, %s185
          %p187 = scmp.ne.s32.totalorder 0, %s183
          %s188 = smul.addr %s178, 2
          %s189 = smul.addr %s188, 8
          %s190 = scalar_lea.hbm %s1, %s189
          %s191 = smul.u32 16, %s181
          %s192 = sshll.u32 %s190, 4
          %s193 = int_to_ptr.hbm [resolvable:$true] %s192
          %s194 = sshll.u32 %s177, 4
          %s195 = int_to_ptr.vmem [resolvable:$true] %s194
          %s196 = sshll.u32 %s191, 4
          %200 = dma.hbm_to_vmem [thread:$0]  (%p187), %s193, %s196, %s195, %s174, 256, 256, 16
        $region28: #{tpu_custom_call.1} parent=23 // pred_fallthru
          _
        // Predicated region
        $region29: #{tpu_custom_call.1} parent=23 // pred_check
          %p201 = pneg %p113
        $region30: #{tpu_custom_call.1} parent=23 // pred_check_branch
          %203 = sbr.rel (%p201) target = $region32
        $region31: #{tpu_custom_call.1} parent=23 // pred_region
          %s204 = smul.u32 38, %s25
          %s205 = ssub.s32 75, %s204
          %p206 = scmp.lt.s32.totalorder %s205, 38
          %s207 = scalar_select %p206, %s205, 38
          %s208 = smul.u32 8, %s207
          %p209 = scmp.lt.s32.totalorder %s204, 74
          %s210 = scalar_select %p209, %s204, 74
          %s211 = smul.addr %s210, 8
          %s212 = scalar_lea.vmem %s4, %s211
          %s213 = smul.u32 38, %s25
          %s214 = ssub.s32 75, %s213
          %p215 = scmp.lt.s32.totalorder %s214, 38
          %s216 = scalar_select %p215, %s214, 38
          %s217 = smul.u32 8, %s216
        $region32: #{tpu_custom_call.1} parent=23 // pred_fallthru
          _
      $region24: #{tpu_custom_call.1} parent=5 // pred_fallthru
        _
      %p218 = scmp.le.s32.totalorder 1, %s25
      %p219 = scmp.lt.s32.totalorder %s25, 3
      %p220 = pnand %p218, %p219
      %p221 = pneg %p220
      // Predicated region
      $region33: #{tpu_custom_call.1} parent=5 // pred_check
        _
      $region34: #{tpu_custom_call.1} parent=5 // pred_check_branch
        %223 = sbr.rel (%p220) target = $region36
      $region35: #{tpu_custom_call.1} parent=5 // pred_region
        %s224 = ssub.s32 %s25, 1
        %s225 = sand.u32 %s38, 1
        %s226 = scalar_lea.sflag [#allocation5], %s225
        %s227 = sand.u32 %s38, 1
        %s228 = smul.addr %s227, 608
        %s229 = scalar_lea.vmem [#allocation4], %s228
        // Predicated region
        $region37: #{tpu_custom_call.1} parent=35 // pred_check
          %p230 = pneg %p51
        $region38: #{tpu_custom_call.1} parent=35 // pred_check_branch
          %232 = sbr.rel (%p230) target = $region40
        $region39: #{tpu_custom_call.1} parent=35 // pred_region
          %234 = dma.done %s226, 9728
        $region40: #{tpu_custom_call.1} parent=35 // pred_fallthru
          _
        %s235 = sand.u32 %s38, 1
        %s236 = scalar_lea.sflag [#allocation5], %s235
        %s237 = sand.u32 %s38, 1
        %s238 = smul.addr %s237, 608
        %s239 = scalar_lea.vmem [#allocation4], %s238
        %p240 = pneg %p51
        %p241 = pneg %p48
        %p242 = pneg %p72
        %p243 = pneg %p69
        %p244 = pneg %p93
        %p245 = pneg %p90
        %s246 = smul.u32 38, %s30
        %s247 = ssub.s32 75, %s246
        %p248 = scmp.lt.s32.totalorder %s247, 38
        %s249 = scalar_select %p248, %s247, 38
        %s250 = smul.u32 8, %s249
        %p251 = scmp.lt.s32.totalorder %s246, 74
        %s252 = scalar_select %p251, %s246, 74
        %s253 = smul.addr %s252, 8
        %s254 = scalar_lea.vmem %s4, %s253
        %p255 = pneg %p119
        %p256 = pneg %p116
        %p257 = pneg %p145
        %p258 = pneg %p142
        %s259 = sand.u32 %s132, 1
        %s260 = scalar_lea.sflag [#allocation6], %s259
        %s261 = sand.u32 %s132, 1
        %s262 = smul.addr %s261, 608
        %s263 = scalar_lea.vmem [#allocation7], %s262
        %s264 = smul.u32 38, %s30
        %s265 = ssub.s32 75, %s264
        %p266 = scmp.lt.s32.totalorder %s265, 38
        %s267 = scalar_select %p266, %s265, 38
        %s268 = smul.u32 8, %s267
        %s269 = smul.u32 %s268, 2
        %s270 = smul.u32 38, %s30
        %s271 = ssub.s32 75, %s270
        %p272 = scmp.lt.s32.totalorder %s271, 38
        %s273 = scalar_select %p272, %s271, 38
        %s274 = smul.u32 8, %s273
        %p275 = scmp.lt.s32.totalorder %s270, 74
        %s276 = scalar_select %p275, %s270, 74
        %s277 = smul.addr %s276, 8
        %s278 = scalar_lea.vmem %s4, %s277
        %s279 = smul.u32 38, %s30
        %s280 = ssub.s32 75, %s279
        %p281 = scmp.lt.s32.totalorder %s280, 38
        %s282 = scalar_select %p281, %s280, 38
        %s283 = smul.u32 8, %s282
        %s284 = smul.u32 38, %s30
        %s285 = ssub.s32 75, %s284
        %p286 = scmp.lt.s32.totalorder %s285, 38
        %s287 = scalar_select %p286, %s285, 38
        %s288 = smul.u32 8, %s287
        %s289 = smul.u32 %s288, 2
        %s290 = sld [smem:[#allocation3 + %s30]]
        %p291 = scmp.ne.s32.totalorder %s290, 0
        // Predicated region
        $region41: #{tpu_custom_call.1} parent=35 // pred_check
          %p292 = pneg %p291
        $region42: #{tpu_custom_call.1} parent=35 // pred_check_branch
          %294 = sbr.rel (%p292) target = $region44
        $region43: #{tpu_custom_call.1} parent=35 // pred_region
          %v295 = vld [vmem:[%s229] sm:$0xff]
          %v296 = vld [vmem:[%s229 + $0x8] sm:$0xff]
          %v297 = vld [vmem:[%s229 + $0x10] sm:$0xff]
          %v298 = vld [vmem:[%s229 + $0x18] sm:$0xff]
          %v299 = vld [vmem:[%s229 + $0x20] sm:$0xff]
          %v300 = vld [vmem:[%s229 + $0x28] sm:$0xff]
          %v301 = vld [vmem:[%s229 + $0x30] sm:$0xff]
          %v302 = vld [vmem:[%s229 + $0x38] sm:$0xff]
          %v303 = vld [vmem:[%s229 + $0x40] sm:$0xff]
          %v304 = vld [vmem:[%s229 + $0x48] sm:$0xff]
          %v305 = vld [vmem:[%s229 + $0x50] sm:$0xff]
          %v306 = vld [vmem:[%s229 + $0x58] sm:$0xff]
          %v307 = vld [vmem:[%s229 + $0x60] sm:$0xff]
          %v308 = vld [vmem:[%s229 + $0x68] sm:$0xff]
          %v309 = vld [vmem:[%s229 + $0x70] sm:$0xff]
          %v310 = vld [vmem:[%s229 + $0x78] sm:$0xff]
          %v311 = vld [vmem:[%s229 + $0x80] sm:$0xff]
          %v312 = vld [vmem:[%s229 + $0x88] sm:$0xff]
          %v313 = vld [vmem:[%s229 + $0x90] sm:$0xff]
          %v314 = vld [vmem:[%s229 + $0x98] sm:$0xff]
          %v315 = vld [vmem:[%s229 + $0xa0] sm:$0xff]
          %v316 = vld [vmem:[%s229 + $0xa8] sm:$0xff]
          %v317 = vld [vmem:[%s229 + $0xb0] sm:$0xff]
          %v318 = vld [vmem:[%s229 + $0xb8] sm:$0xff]
          %v319 = vld [vmem:[%s229 + $0xc0] sm:$0xff]
          %v320 = vld [vmem:[%s229 + $0xc8] sm:$0xff]
          %v321 = vld [vmem:[%s229 + $0xd0] sm:$0xff]
          %v322 = vld [vmem:[%s229 + $0xd8] sm:$0xff]
          %v323 = vld [vmem:[%s229 + $0xe0] sm:$0xff]
          %v324 = vld [vmem:[%s229 + $0xe8] sm:$0xff]
          %v325 = vld [vmem:[%s229 + $0xf0] sm:$0xff]
          %v326 = vld [vmem:[%s229 + $0xf8] sm:$0xff]
          %v327 = vld [vmem:[%s229 + $0x100] sm:$0xff]
          %v328 = vld [vmem:[%s229 + $0x108] sm:$0xff]
          %v329 = vld [vmem:[%s229 + $0x110] sm:$0xff]
          %v330 = vld [vmem:[%s229 + $0x118] sm:$0xff]
          %v331 = vld [vmem:[%s229 + $0x120] sm:$0xff]
          %v332 = vld [vmem:[%s229 + $0x128] sm:$0xff]
          %v333 = vld [vmem:[%s229 + $0x130] sm:$0xff]
          %v334 = vld [vmem:[%s229 + $0x138] sm:$0xff]
          %v335 = vld [vmem:[%s229 + $0x140] sm:$0xff]
          %v336 = vld [vmem:[%s229 + $0x148] sm:$0xff]
          %v337 = vld [vmem:[%s229 + $0x150] sm:$0xff]
          %v338 = vld [vmem:[%s229 + $0x158] sm:$0xff]
          %v339 = vld [vmem:[%s229 + $0x160] sm:$0xff]
          %v340 = vld [vmem:[%s229 + $0x168] sm:$0xff]
          %v341 = vld [vmem:[%s229 + $0x170] sm:$0xff]
          %v342 = vld [vmem:[%s229 + $0x178] sm:$0xff]
          %v343 = vld [vmem:[%s229 + $0x180] sm:$0xff]
          %v344 = vld [vmem:[%s229 + $0x188] sm:$0xff]
          %v345 = vld [vmem:[%s229 + $0x190] sm:$0xff]
          %v346 = vld [vmem:[%s229 + $0x198] sm:$0xff]
          %v347 = vld [vmem:[%s229 + $0x1a0] sm:$0xff]
          %v348 = vld [vmem:[%s229 + $0x1a8] sm:$0xff]
          %v349 = vld [vmem:[%s229 + $0x1b0] sm:$0xff]
          %v350 = vld [vmem:[%s229 + $0x1b8] sm:$0xff]
          %v351 = vld [vmem:[%s229 + $0x1c0] sm:$0xff]
          %v352 = vld [vmem:[%s229 + $0x1c8] sm:$0xff]
          %v353 = vld [vmem:[%s229 + $0x1d0] sm:$0xff]
          %v354 = vld [vmem:[%s229 + $0x1d8] sm:$0xff]
          %v355 = vld [vmem:[%s229 + $0x1e0] sm:$0xff]
          %v356 = vld [vmem:[%s229 + $0x1e8] sm:$0xff]
          %v357 = vld [vmem:[%s229 + $0x1f0] sm:$0xff]
          %v358 = vld [vmem:[%s229 + $0x1f8] sm:$0xff]
          %v359 = vld [vmem:[%s229 + $0x200] sm:$0xff]
          %v360 = vld [vmem:[%s229 + $0x208] sm:$0xff]
          %v361 = vld [vmem:[%s229 + $0x210] sm:$0xff]
          %v362 = vld [vmem:[%s229 + $0x218] sm:$0xff]
          %v363 = vld [vmem:[%s229 + $0x220] sm:$0xff]
          %v364 = vld [vmem:[%s229 + $0x228] sm:$0xff]
          %v365 = vld [vmem:[%s229 + $0x230] sm:$0xff]
          %v366 = vld [vmem:[%s229 + $0x238] sm:$0xff]
          %v367 = vld [vmem:[%s229 + $0x240] sm:$0xff]
          %v368 = vld [vmem:[%s229 + $0x248] sm:$0xff]
          %v369 = vld [vmem:[%s229 + $0x250] sm:$0xff]
          %v370 = vld [vmem:[%s229 + $0x258] sm:$0xff]
          %v371 = vld [vmem:[%s278] sm:$0xff]
          %v372 = vld [vmem:[%s278 + $0x8] sm:$0xff]
          %v373 = vld [vmem:[%s278 + $0x10] sm:$0xff]
          %v374 = vld [vmem:[%s278 + $0x18] sm:$0xff]
          %v375 = vld [vmem:[%s278 + $0x20] sm:$0xff]
          %v376 = vld [vmem:[%s278 + $0x28] sm:$0xff]
          %v377 = vld [vmem:[%s278 + $0x30] sm:$0xff]
          %v378 = vld [vmem:[%s278 + $0x38] sm:$0xff]
          %v379 = vld [vmem:[%s278 + $0x40] sm:$0xff]
          %v380 = vld [vmem:[%s278 + $0x48] sm:$0xff]
          %v381 = vld [vmem:[%s278 + $0x50] sm:$0xff]
          %v382 = vld [vmem:[%s278 + $0x58] sm:$0xff]
          %v383 = vld [vmem:[%s278 + $0x60] sm:$0xff]
          %v384 = vld [vmem:[%s278 + $0x68] sm:$0xff]
          %v385 = vld [vmem:[%s278 + $0x70] sm:$0xff]
          %v386 = vld [vmem:[%s278 + $0x78] sm:$0xff]
          %v387 = vld [vmem:[%s278 + $0x80] sm:$0xff]
          %v388 = vld [vmem:[%s278 + $0x88] sm:$0xff]
          %v389 = vld [vmem:[%s278 + $0x90] sm:$0xff]
          %v390 = vld [vmem:[%s278 + $0x98] sm:$0xff]
          %v391 = vld [vmem:[%s278 + $0xa0] sm:$0xff]
          %v392 = vld [vmem:[%s278 + $0xa8] sm:$0xff]
          %v393 = vld [vmem:[%s278 + $0xb0] sm:$0xff]
          %v394 = vld [vmem:[%s278 + $0xb8] sm:$0xff]
          %v395 = vld [vmem:[%s278 + $0xc0] sm:$0xff]
          %v396 = vld [vmem:[%s278 + $0xc8] sm:$0xff]
          %v397 = vld [vmem:[%s278 + $0xd0] sm:$0xff]
          %v398 = vld [vmem:[%s278 + $0xd8] sm:$0xff]
          %v399 = vld [vmem:[%s278 + $0xe0] sm:$0xff]
          %v400 = vld [vmem:[%s278 + $0xe8] sm:$0xff]
          %v401 = vld [vmem:[%s278 + $0xf0] sm:$0xff]
          %v402 = vld [vmem:[%s278 + $0xf8] sm:$0xff]
          %v403 = vld [vmem:[%s278 + $0x100] sm:$0xff]
          %v404 = vld [vmem:[%s278 + $0x108] sm:$0xff]
          %v405 = vld [vmem:[%s278 + $0x110] sm:$0xff]
          %v406 = vld [vmem:[%s278 + $0x118] sm:$0xff]
          %v407 = vld [vmem:[%s278 + $0x120] sm:$0xff]
          %v408 = vld [vmem:[%s278 + $0x128] sm:$0xff]
          %v409 = vpack.c.bf16 %v297, %v295
          %v410 = vpack.c.bf16 %v298, %v296
          %v411 = vpack.c.bf16 %v301, %v299
          %v412 = vpack.c.bf16 %v302, %v300
          %v413 = vpack.c.bf16 %v305, %v303
          %v414 = vpack.c.bf16 %v306, %v304
          %v415 = vpack.c.bf16 %v309, %v307
          %v416 = vpack.c.bf16 %v310, %v308
          %v417 = vpack.c.bf16 %v313, %v311
          %v418 = vpack.c.bf16 %v314, %v312
          %v419 = vpack.c.bf16 %v317, %v315
          %v420 = vpack.c.bf16 %v318, %v316
          %v421 = vpack.c.bf16 %v321, %v319
          %v422 = vpack.c.bf16 %v322, %v320
          %v423 = vpack.c.bf16 %v325, %v323
          %v424 = vpack.c.bf16 %v326, %v324
          %v425 = vpack.c.bf16 %v329, %v327
          %v426 = vpack.c.bf16 %v330, %v328
          %v427 = vpack.c.bf16 %v333, %v331
          %v428 = vpack.c.bf16 %v334, %v332
          %v429 = vpack.c.bf16 %v337, %v335
          %v430 = vpack.c.bf16 %v338, %v336
          %v431 = vpack.c.bf16 %v341, %v339
          %v432 = vpack.c.bf16 %v342, %v340
          %v433 = vpack.c.bf16 %v345, %v343
          %v434 = vpack.c.bf16 %v346, %v344
          %v435 = vpack.c.bf16 %v349, %v347
          %v436 = vpack.c.bf16 %v350, %v348
          %v437 = vpack.c.bf16 %v353, %v351
          %v438 = vpack.c.bf16 %v354, %v352
          %v439 = vpack.c.bf16 %v357, %v355
          %v440 = vpack.c.bf16 %v358, %v356
          %v441 = vpack.c.bf16 %v361, %v359
          %v442 = vpack.c.bf16 %v362, %v360
          %v443 = vpack.c.bf16 %v365, %v363
          %v444 = vpack.c.bf16 %v366, %v364
          %v445 = vpack.c.bf16 %v369, %v367
          %v446 = vpack.c.bf16 %v370, %v368
          %v447 = vld [vmem:[%s2] sm:$0xff]
          %v448 = vld [vmem:[%s2 + $0x8] sm:$0xff]
          %v449 = vld [vmem:[%s2 + $0x10] sm:$0xff]
          %v450 = vld [vmem:[%s2 + $0x18] sm:$0xff]
          %v451 = vld [vmem:[%s2 + $0x20] sm:$0xff]
          %v452 = vld [vmem:[%s2 + $0x28] sm:$0xff]
          %v453 = vld [vmem:[%s2 + $0x30] sm:$0xff]
          %v454 = vld [vmem:[%s2 + $0x38] sm:$0xff]
          %v455 = vld [vmem:[%s2 + $0x40] sm:$0xff]
          %v456 = vld [vmem:[%s2 + $0x48] sm:$0xff]
          %v457 = vld [vmem:[%s2 + $0x50] sm:$0xff]
          %v458 = vld [vmem:[%s2 + $0x58] sm:$0xff]
          %v459 = vld [vmem:[%s2 + $0x60] sm:$0xff]
          %v460 = vld [vmem:[%s2 + $0x68] sm:$0xff]
          %v461 = vld [vmem:[%s2 + $0x70] sm:$0xff]
          %v462 = vld [vmem:[%s2 + $0x78] sm:$0xff]
          %v463 = vld [vmem:[%s2 + $0x80] sm:$0xff]
          %v464 = vld [vmem:[%s2 + $0x88] sm:$0xff]
          %v465 = vld [vmem:[%s2 + $0x90] sm:$0xff]
          %v466 = vld [vmem:[%s2 + $0x98] sm:$0xff]
          %v467 = vld [vmem:[%s2 + $0xa0] sm:$0xff]
          %v468 = vld [vmem:[%s2 + $0xa8] sm:$0xff]
          %v469 = vld [vmem:[%s2 + $0xb0] sm:$0xff]
          %v470 = vld [vmem:[%s2 + $0xb8] sm:$0xff]
          %v471 = vld [vmem:[%s2 + $0xc0] sm:$0xff]
          %v472 = vld [vmem:[%s2 + $0xc8] sm:$0xff]
          %v473 = vld [vmem:[%s2 + $0xd0] sm:$0xff]
          %v474 = vld [vmem:[%s2 + $0xd8] sm:$0xff]
          %v475 = vld [vmem:[%s2 + $0xe0] sm:$0xff]
          %v476 = vld [vmem:[%s2 + $0xe8] sm:$0xff]
          %v477 = vld [vmem:[%s2 + $0xf0] sm:$0xff]
          %v478 = vld [vmem:[%s2 + $0xf8] sm:$0xff]
          %v479 = vld [vmem:[%s3] sm:$0x3]
          %v481 = vperm.slane %v479, 0
          %v482 = vperm.slane %v479, 1
          %v517 = vunpack.c.l.b16 %v447
          %v518 = vunpack.c.h.b16 %v447
          %v519 = vunpack.c.l.b16 %v448
          %v520 = vunpack.c.h.b16 %v448
          %v521 = vunpack.c.l.b16 %v449
          %v522 = vunpack.c.h.b16 %v449
          %v523 = vunpack.c.l.b16 %v450
          %v524 = vunpack.c.h.b16 %v450
          %v525 = vunpack.c.l.b16 %v451
          %v526 = vunpack.c.h.b16 %v451
          %v527 = vunpack.c.l.b16 %v452
          %v528 = vunpack.c.h.b16 %v452
          %v529 = vunpack.c.l.b16 %v453
          %v530 = vunpack.c.h.b16 %v453
          %v531 = vunpack.c.l.b16 %v454
          %v532 = vunpack.c.h.b16 %v454
          %v533 = vunpack.c.l.b16 %v455
          %v534 = vunpack.c.h.b16 %v455
          %v535 = vunpack.c.l.b16 %v456
          %v536 = vunpack.c.h.b16 %v456
          %v537 = vunpack.c.l.b16 %v457
          %v538 = vunpack.c.h.b16 %v457
          %v539 = vunpack.c.l.b16 %v458
          %v540 = vunpack.c.h.b16 %v458
          %v541 = vunpack.c.l.b16 %v459
          %v542 = vunpack.c.h.b16 %v459
          %v543 = vunpack.c.l.b16 %v460
          %v544 = vunpack.c.h.b16 %v460
          %v545 = vunpack.c.l.b16 %v461
          %v546 = vunpack.c.h.b16 %v461
          %v547 = vunpack.c.l.b16 %v462
          %v548 = vunpack.c.h.b16 %v462
          %v549 = vunpack.c.l.b16 %v463
          %v550 = vunpack.c.h.b16 %v463
          %v551 = vunpack.c.l.b16 %v464
          %v552 = vunpack.c.h.b16 %v464
          %v553 = vunpack.c.l.b16 %v465
          %v554 = vunpack.c.h.b16 %v465
          %v555 = vunpack.c.l.b16 %v466
          %v556 = vunpack.c.h.b16 %v466
          %v557 = vunpack.c.l.b16 %v467
          %v558 = vunpack.c.h.b16 %v467
          %v559 = vunpack.c.l.b16 %v468
          %v560 = vunpack.c.h.b16 %v468
          %v561 = vunpack.c.l.b16 %v469
          %v562 = vunpack.c.h.b16 %v469
          %v563 = vunpack.c.l.b16 %v470
          %v564 = vunpack.c.h.b16 %v470
          %v565 = vunpack.c.l.b16 %v471
          %v566 = vunpack.c.h.b16 %v471
          %v567 = vunpack.c.l.b16 %v472
          %v568 = vunpack.c.h.b16 %v472
          %v569 = vunpack.c.l.b16 %v473
          %v570 = vunpack.c.h.b16 %v473
          %v571 = vunpack.c.l.b16 %v474
          %v572 = vunpack.c.h.b16 %v474
          %v573 = vunpack.c.l.b16 %v475
          %v574 = vunpack.c.h.b16 %v475
          %v575 = vunpack.c.l.b16 %v476
          %v576 = vunpack.c.h.b16 %v476
          %v577 = vunpack.c.l.b16 %v477
          %v578 = vunpack.c.h.b16 %v477
          %v579 = vunpack.c.l.b16 %v478
          %v580 = vunpack.c.h.b16 %v478
          %v581 = vpack.c.b16 %v519, %v517
          %v582 = vpack.c.b16 %v520, %v518
          %v583 = vpack.c.b16 %v523, %v521
          %v584 = vpack.c.b16 %v524, %v522
          %v585 = vpack.c.b16 %v527, %v525
          %v586 = vpack.c.b16 %v528, %v526
          %v587 = vpack.c.b16 %v531, %v529
          %v588 = vpack.c.b16 %v532, %v530
          %v589 = vpack.c.b16 %v535, %v533
          %v590 = vpack.c.b16 %v536, %v534
          %v591 = vpack.c.b16 %v539, %v537
          %v592 = vpack.c.b16 %v540, %v538
          %v593 = vpack.c.b16 %v543, %v541
          %v594 = vpack.c.b16 %v544, %v542
          %v595 = vpack.c.b16 %v547, %v545
          %v596 = vpack.c.b16 %v548, %v546
          %v597 = vpack.c.b16 %v551, %v549
          %v598 = vpack.c.b16 %v552, %v550
          %v599 = vpack.c.b16 %v555, %v553
          %v600 = vpack.c.b16 %v556, %v554
          %v601 = vpack.c.b16 %v559, %v557
          %v602 = vpack.c.b16 %v560, %v558
          %v603 = vpack.c.b16 %v563, %v561
          %v604 = vpack.c.b16 %v564, %v562
          %v605 = vpack.c.b16 %v567, %v565
          %v606 = vpack.c.b16 %v568, %v566
          %v607 = vpack.c.b16 %v571, %v569
          %v608 = vpack.c.b16 %v572, %v570
          %v609 = vpack.c.b16 %v575, %v573
          %v610 = vpack.c.b16 %v576, %v574
          %v611 = vpack.c.b16 %v579, %v577
          %v612 = vpack.c.b16 %v580, %v578
          %645 = vmatpush.bf16.msra.mxu0 %v595
          %646 = vmatpush.bf16.msra.mxu0 %v593
          %647 = vmatpush.bf16.msra.mxu0 %v591
          %648 = vmatpush.bf16.msra.mxu0 %v589
          %649 = vmatpush.bf16.msra.mxu0 %v587
          %650 = vmatpush.bf16.msra.mxu0 %v585
          %651 = vmatpush.bf16.msra.mxu0 %v583
          %652 = vmatpush.bf16.msra.mxu0 %v581
          %653 = vmatmul.bf16.gmra.mxu0 %v409
          %v654 = vpop.f32.mrf.mxu0
          %v655 = vadd.f32 %v481, %v654
          %v656 = vpop.f32.mrf.mxu0
          %v657 = vadd.f32 %v481, %v656
          %658 = vmatmul.bf16.gmra.mxu0 %v411
          %v659 = vpop.f32.mrf.mxu0
          %v660 = vadd.f32 %v481, %v659
          %v661 = vpop.f32.mrf.mxu0
          %v662 = vadd.f32 %v481, %v661
          %663 = vmatmul.bf16.gmra.mxu0 %v413
          %v664 = vpop.f32.mrf.mxu0
          %v665 = vadd.f32 %v481, %v664
          %v666 = vpop.f32.mrf.mxu0
          %v667 = vadd.f32 %v481, %v666
          %668 = vmatmul.bf16.gmra.mxu0 %v415
          %v669 = vpop.f32.mrf.mxu0
          %v670 = vadd.f32 %v481, %v669
          %v671 = vpop.f32.mrf.mxu0
          %v672 = vadd.f32 %v481, %v671
          %673 = vmatmul.bf16.gmra.mxu0 %v417
          %v674 = vpop.f32.mrf.mxu0
          %v675 = vadd.f32 %v481, %v674
          %v676 = vpop.f32.mrf.mxu0
          %v677 = vadd.f32 %v481, %v676
          %678 = vmatmul.bf16.gmra.mxu0 %v419
          %v679 = vpop.f32.mrf.mxu0
          %v680 = vadd.f32 %v481, %v679
          %v681 = vpop.f32.mrf.mxu0
          %v682 = vadd.f32 %v481, %v681
          %683 = vmatmul.bf16.gmra.mxu0 %v421
          %v684 = vpop.f32.mrf.mxu0
          %v685 = vadd.f32 %v481, %v684
          %v686 = vpop.f32.mrf.mxu0
          %v687 = vadd.f32 %v481, %v686
          %688 = vmatmul.bf16.gmra.mxu0 %v423
          %v689 = vpop.f32.mrf.mxu0
          %v690 = vadd.f32 %v481, %v689
          %v691 = vpop.f32.mrf.mxu0
          %v692 = vadd.f32 %v481, %v691
          %693 = vmatmul.bf16.gmra.mxu0 %v425
          %v694 = vpop.f32.mrf.mxu0
          %v695 = vadd.f32 %v481, %v694
          %v696 = vpop.f32.mrf.mxu0
          %v697 = vadd.f32 %v481, %v696
          %698 = vmatmul.bf16.gmra.mxu0 %v427
          %v699 = vpop.f32.mrf.mxu0
          %v700 = vadd.f32 %v481, %v699
          %v701 = vpop.f32.mrf.mxu0
          %v702 = vadd.f32 %v481, %v701
          %703 = vmatmul.bf16.gmra.mxu0 %v429
          %v704 = vpop.f32.mrf.mxu0
          %v705 = vadd.f32 %v481, %v704
          %v706 = vpop.f32.mrf.mxu0
          %v707 = vadd.f32 %v481, %v706
          %708 = vmatmul.bf16.gmra.mxu0 %v431
          %v709 = vpop.f32.mrf.mxu0
          %v710 = vadd.f32 %v481, %v709
          %v711 = vpop.f32.mrf.mxu0
          %v712 = vadd.f32 %v481, %v711
          %713 = vmatmul.bf16.gmra.mxu0 %v433
          %v714 = vpop.f32.mrf.mxu0
          %v715 = vadd.f32 %v481, %v714
          %v716 = vpop.f32.mrf.mxu0
          %v717 = vadd.f32 %v481, %v716
          %718 = vmatmul.bf16.gmra.mxu0 %v435
          %v719 = vpop.f32.mrf.mxu0
          %v720 = vadd.f32 %v481, %v719
          %v721 = vpop.f32.mrf.mxu0
          %v722 = vadd.f32 %v481, %v721
          %723 = vmatmul.bf16.gmra.mxu0 %v437
          %v724 = vpop.f32.mrf.mxu0
          %v725 = vadd.f32 %v481, %v724
          %v726 = vpop.f32.mrf.mxu0
          %v727 = vadd.f32 %v481, %v726
          %728 = vmatmul.bf16.gmra.mxu0 %v439
          %v729 = vpop.f32.mrf.mxu0
          %v730 = vadd.f32 %v481, %v729
          %v731 = vpop.f32.mrf.mxu0
          %v732 = vadd.f32 %v481, %v731
          %733 = vmatmul.bf16.gmra.mxu0 %v441
          %v734 = vpop.f32.mrf.mxu0
          %v735 = vadd.f32 %v481, %v734
          %v736 = vpop.f32.mrf.mxu0
          %v737 = vadd.f32 %v481, %v736
          %738 = vmatmul.bf16.gmra.mxu0 %v443
          %v739 = vpop.f32.mrf.mxu0
          %v740 = vadd.f32 %v481, %v739
          %v741 = vpop.f32.mrf.mxu0
          %v742 = vadd.f32 %v481, %v741
          %743 = vmatmul.bf16.gmra.mxu0 %v445
          %v744 = vpop.f32.mrf.mxu0
          %v745 = vadd.f32 %v481, %v744
          %v746 = vpop.f32.mrf.mxu0
          %v747 = vadd.f32 %v481, %v746
          %748 = vdwg.mxu0
          %749 = vmatpush.bf16.msra.mxu0 %v611
          %750 = vmatpush.bf16.msra.mxu0 %v609
          %751 = vmatpush.bf16.msra.mxu0 %v607
          %752 = vmatpush.bf16.msra.mxu0 %v605
          %753 = vmatpush.bf16.msra.mxu0 %v603
          %754 = vmatpush.bf16.msra.mxu0 %v601
          %755 = vmatpush.bf16.msra.mxu0 %v599
          %756 = vmatpush.bf16.msra.mxu0 %v597
          %757 = vmatmul.bf16.gmra.mxu0 %v410
          %v758 = vpop.f32.mrf.mxu0
          %v759 = vadd.f32 %v655, %v758
          %v760 = vpop.f32.mrf.mxu0
          %v761 = vadd.f32 %v657, %v760
          %762 = vmatmul.bf16.gmra.mxu0 %v412
          %v763 = vpop.f32.mrf.mxu0
          %v764 = vadd.f32 %v660, %v763
          %v765 = vpop.f32.mrf.mxu0
          %v766 = vadd.f32 %v662, %v765
          %767 = vmatmul.bf16.gmra.mxu0 %v414
          %v768 = vpop.f32.mrf.mxu0
          %v769 = vadd.f32 %v665, %v768
          %v770 = vpop.f32.mrf.mxu0
          %v771 = vadd.f32 %v667, %v770
          %772 = vmatmul.bf16.gmra.mxu0 %v416
          %v773 = vpop.f32.mrf.mxu0
          %v774 = vadd.f32 %v670, %v773
          %v775 = vpop.f32.mrf.mxu0
          %v776 = vadd.f32 %v672, %v775
          %777 = vmatmul.bf16.gmra.mxu0 %v418
          %v778 = vpop.f32.mrf.mxu0
          %v779 = vadd.f32 %v675, %v778
          %v780 = vpop.f32.mrf.mxu0
          %v781 = vadd.f32 %v677, %v780
          %782 = vmatmul.bf16.gmra.mxu0 %v420
          %v783 = vpop.f32.mrf.mxu0
          %v784 = vadd.f32 %v680, %v783
          %v785 = vpop.f32.mrf.mxu0
          %v786 = vadd.f32 %v682, %v785
          %787 = vmatmul.bf16.gmra.mxu0 %v422
          %v788 = vpop.f32.mrf.mxu0
          %v789 = vadd.f32 %v685, %v788
          %v790 = vpop.f32.mrf.mxu0
          %v791 = vadd.f32 %v687, %v790
          %792 = vmatmul.bf16.gmra.mxu0 %v424
          %v793 = vpop.f32.mrf.mxu0
          %v794 = vadd.f32 %v690, %v793
          %v795 = vpop.f32.mrf.mxu0
          %v796 = vadd.f32 %v692, %v795
          %797 = vmatmul.bf16.gmra.mxu0 %v426
          %v798 = vpop.f32.mrf.mxu0
          %v799 = vadd.f32 %v695, %v798
          %v800 = vpop.f32.mrf.mxu0
          %v801 = vadd.f32 %v697, %v800
          %802 = vmatmul.bf16.gmra.mxu0 %v428
          %v803 = vpop.f32.mrf.mxu0
          %v804 = vadd.f32 %v700, %v803
          %v805 = vpop.f32.mrf.mxu0
          %v806 = vadd.f32 %v702, %v805
          %807 = vmatmul.bf16.gmra.mxu0 %v430
          %v808 = vpop.f32.mrf.mxu0
          %v809 = vadd.f32 %v705, %v808
          %v810 = vpop.f32.mrf.mxu0
          %v811 = vadd.f32 %v707, %v810
          %812 = vmatmul.bf16.gmra.mxu0 %v432
          %v813 = vpop.f32.mrf.mxu0
          %v814 = vadd.f32 %v710, %v813
          %v815 = vpop.f32.mrf.mxu0
          %v816 = vadd.f32 %v712, %v815
          %817 = vmatmul.bf16.gmra.mxu0 %v434
          %v818 = vpop.f32.mrf.mxu0
          %v819 = vadd.f32 %v715, %v818
          %v820 = vpop.f32.mrf.mxu0
          %v821 = vadd.f32 %v717, %v820
          %822 = vmatmul.bf16.gmra.mxu0 %v436
          %v823 = vpop.f32.mrf.mxu0
          %v824 = vadd.f32 %v720, %v823
          %v825 = vpop.f32.mrf.mxu0
          %v826 = vadd.f32 %v722, %v825
          %827 = vmatmul.bf16.gmra.mxu0 %v438
          %v828 = vpop.f32.mrf.mxu0
          %v829 = vadd.f32 %v725, %v828
          %v830 = vpop.f32.mrf.mxu0
          %v831 = vadd.f32 %v727, %v830
          %832 = vmatmul.bf16.gmra.mxu0 %v440
          %v833 = vpop.f32.mrf.mxu0
          %v834 = vadd.f32 %v730, %v833
          %v835 = vpop.f32.mrf.mxu0
          %v836 = vadd.f32 %v732, %v835
          %837 = vmatmul.bf16.gmra.mxu0 %v442
          %v838 = vpop.f32.mrf.mxu0
          %v839 = vadd.f32 %v735, %v838
          %v840 = vpop.f32.mrf.mxu0
          %v841 = vadd.f32 %v737, %v840
          %842 = vmatmul.bf16.gmra.mxu0 %v444
          %v843 = vpop.f32.mrf.mxu0
          %v844 = vadd.f32 %v740, %v843
          %v845 = vpop.f32.mrf.mxu0
          %v846 = vadd.f32 %v742, %v845
          %847 = vmatmul.bf16.gmra.mxu0 %v446
          %v848 = vpop.f32.mrf.mxu0
          %v849 = vadd.f32 %v745, %v848
          %v850 = vpop.f32.mrf.mxu0
          %v851 = vadd.f32 %v747, %v850
          %852 = vdwg.mxu0
          %853 = vmatpush.bf16.msra.mxu0 %v596
          %854 = vmatpush.bf16.msra.mxu0 %v594
          %855 = vmatpush.bf16.msra.mxu0 %v592
          %856 = vmatpush.bf16.msra.mxu0 %v590
          %857 = vmatpush.bf16.msra.mxu0 %v588
          %858 = vmatpush.bf16.msra.mxu0 %v586
          %859 = vmatpush.bf16.msra.mxu0 %v584
          %860 = vmatpush.bf16.msra.mxu0 %v582
          %861 = vmatmul.bf16.gmra.mxu0 %v409
          %v862 = vpop.f32.mrf.mxu0
          %v863 = vadd.f32 %v482, %v862
          %v864 = vpop.f32.mrf.mxu0
          %v865 = vadd.f32 %v482, %v864
          %866 = vmatmul.bf16.gmra.mxu0 %v411
          %v867 = vpop.f32.mrf.mxu0
          %v868 = vadd.f32 %v482, %v867
          %v869 = vpop.f32.mrf.mxu0
          %v870 = vadd.f32 %v482, %v869
          %871 = vmatmul.bf16.gmra.mxu0 %v413
          %v872 = vpop.f32.mrf.mxu0
          %v873 = vadd.f32 %v482, %v872
          %v874 = vpop.f32.mrf.mxu0
          %v875 = vadd.f32 %v482, %v874
          %876 = vmatmul.bf16.gmra.mxu0 %v415
          %v877 = vpop.f32.mrf.mxu0
          %v878 = vadd.f32 %v482, %v877
          %v879 = vpop.f32.mrf.mxu0
          %v880 = vadd.f32 %v482, %v879
          %881 = vmatmul.bf16.gmra.mxu0 %v417
          %v882 = vpop.f32.mrf.mxu0
          %v883 = vadd.f32 %v482, %v882
          %v884 = vpop.f32.mrf.mxu0
          %v885 = vadd.f32 %v482, %v884
          %886 = vmatmul.bf16.gmra.mxu0 %v419
          %v887 = vpop.f32.mrf.mxu0
          %v888 = vadd.f32 %v482, %v887
          %v889 = vpop.f32.mrf.mxu0
          %v890 = vadd.f32 %v482, %v889
          %891 = vmatmul.bf16.gmra.mxu0 %v421
          %v892 = vpop.f32.mrf.mxu0
          %v893 = vadd.f32 %v482, %v892
          %v894 = vpop.f32.mrf.mxu0
          %v895 = vadd.f32 %v482, %v894
          %896 = vmatmul.bf16.gmra.mxu0 %v423
          %v897 = vpop.f32.mrf.mxu0
          %v898 = vadd.f32 %v482, %v897
          %v899 = vpop.f32.mrf.mxu0
          %v900 = vadd.f32 %v482, %v899
          %901 = vmatmul.bf16.gmra.mxu0 %v425
          %v902 = vpop.f32.mrf.mxu0
          %v903 = vadd.f32 %v482, %v902
          %v904 = vpop.f32.mrf.mxu0
          %v905 = vadd.f32 %v482, %v904
          %906 = vmatmul.bf16.gmra.mxu0 %v427
          %v907 = vpop.f32.mrf.mxu0
          %v908 = vadd.f32 %v482, %v907
          %v909 = vpop.f32.mrf.mxu0
          %v910 = vadd.f32 %v482, %v909
          %911 = vmatmul.bf16.gmra.mxu0 %v429
          %v912 = vpop.f32.mrf.mxu0
          %v913 = vadd.f32 %v482, %v912
          %v914 = vpop.f32.mrf.mxu0
          %v915 = vadd.f32 %v482, %v914
          %916 = vmatmul.bf16.gmra.mxu0 %v431
          %v917 = vpop.f32.mrf.mxu0
          %v918 = vadd.f32 %v482, %v917
          %v919 = vpop.f32.mrf.mxu0
          %v920 = vadd.f32 %v482, %v919
          %921 = vmatmul.bf16.gmra.mxu0 %v433
          %v922 = vpop.f32.mrf.mxu0
          %v923 = vadd.f32 %v482, %v922
          %v924 = vpop.f32.mrf.mxu0
          %v925 = vadd.f32 %v482, %v924
          %926 = vmatmul.bf16.gmra.mxu0 %v435
          %v927 = vpop.f32.mrf.mxu0
          %v928 = vadd.f32 %v482, %v927
          %v929 = vpop.f32.mrf.mxu0
          %v930 = vadd.f32 %v482, %v929
          %931 = vmatmul.bf16.gmra.mxu0 %v437
          %v932 = vpop.f32.mrf.mxu0
          %v933 = vadd.f32 %v482, %v932
          %v934 = vpop.f32.mrf.mxu0
          %v935 = vadd.f32 %v482, %v934
          %936 = vmatmul.bf16.gmra.mxu0 %v439
          %v937 = vpop.f32.mrf.mxu0
          %v938 = vadd.f32 %v482, %v937
          %v939 = vpop.f32.mrf.mxu0
          %v940 = vadd.f32 %v482, %v939
          %941 = vmatmul.bf16.gmra.mxu0 %v441
          %v942 = vpop.f32.mrf.mxu0
          %v943 = vadd.f32 %v482, %v942
          %v944 = vpop.f32.mrf.mxu0
          %v945 = vadd.f32 %v482, %v944
          %946 = vmatmul.bf16.gmra.mxu0 %v443
          %v947 = vpop.f32.mrf.mxu0
          %v948 = vadd.f32 %v482, %v947
          %v949 = vpop.f32.mrf.mxu0
          %v950 = vadd.f32 %v482, %v949
          %951 = vmatmul.bf16.gmra.mxu0 %v445
          %v952 = vpop.f32.mrf.mxu0
          %v953 = vadd.f32 %v482, %v952
          %v954 = vpop.f32.mrf.mxu0
          %v955 = vadd.f32 %v482, %v954
          %956 = vdwg.mxu0
          %957 = vmatpush.bf16.msra.mxu0 %v612
          %958 = vmatpush.bf16.msra.mxu0 %v610
          %959 = vmatpush.bf16.msra.mxu0 %v608
          %960 = vmatpush.bf16.msra.mxu0 %v606
          %961 = vmatpush.bf16.msra.mxu0 %v604
          %962 = vmatpush.bf16.msra.mxu0 %v602
          %963 = vmatpush.bf16.msra.mxu0 %v600
          %964 = vmatpush.bf16.msra.mxu0 %v598
          %965 = vmatmul.bf16.gmra.mxu0 %v410
          %v966 = vpop.f32.mrf.mxu0
          %v967 = vadd.f32 %v863, %v966
          %v968 = vpop.f32.mrf.mxu0
          %v969 = vadd.f32 %v865, %v968
          %970 = vmatmul.bf16.gmra.mxu0 %v412
          %v971 = vpop.f32.mrf.mxu0
          %v972 = vadd.f32 %v868, %v971
          %v973 = vpop.f32.mrf.mxu0
          %v974 = vadd.f32 %v870, %v973
          %975 = vmatmul.bf16.gmra.mxu0 %v414
          %v976 = vpop.f32.mrf.mxu0
          %v977 = vadd.f32 %v873, %v976
          %v978 = vpop.f32.mrf.mxu0
          %v979 = vadd.f32 %v875, %v978
          %980 = vmatmul.bf16.gmra.mxu0 %v416
          %v981 = vpop.f32.mrf.mxu0
          %v982 = vadd.f32 %v878, %v981
          %v983 = vpop.f32.mrf.mxu0
          %v984 = vadd.f32 %v880, %v983
          %985 = vmatmul.bf16.gmra.mxu0 %v418
          %v986 = vpop.f32.mrf.mxu0
          %v987 = vadd.f32 %v883, %v986
          %v988 = vpop.f32.mrf.mxu0
          %v989 = vadd.f32 %v885, %v988
          %990 = vmatmul.bf16.gmra.mxu0 %v420
          %v991 = vpop.f32.mrf.mxu0
          %v992 = vadd.f32 %v888, %v991
          %v993 = vpop.f32.mrf.mxu0
          %v994 = vadd.f32 %v890, %v993
          %995 = vmatmul.bf16.gmra.mxu0 %v422
          %v996 = vpop.f32.mrf.mxu0
          %v997 = vadd.f32 %v893, %v996
          %v998 = vpop.f32.mrf.mxu0
          %v999 = vadd.f32 %v895, %v998
          %1000 = vmatmul.bf16.gmra.mxu0 %v424
          %v1001 = vpop.f32.mrf.mxu0
          %v1002 = vadd.f32 %v898, %v1001
          %v1003 = vpop.f32.mrf.mxu0
          %v1004 = vadd.f32 %v900, %v1003
          %1005 = vmatmul.bf16.gmra.mxu0 %v426
          %v1006 = vpop.f32.mrf.mxu0
          %v1007 = vadd.f32 %v903, %v1006
          %v1008 = vpop.f32.mrf.mxu0
          %v1009 = vadd.f32 %v905, %v1008
          %1010 = vmatmul.bf16.gmra.mxu0 %v428
          %v1011 = vpop.f32.mrf.mxu0
          %v1012 = vadd.f32 %v908, %v1011
          %v1013 = vpop.f32.mrf.mxu0
          %v1014 = vadd.f32 %v910, %v1013
          %1015 = vmatmul.bf16.gmra.mxu0 %v430
          %v1016 = vpop.f32.mrf.mxu0
          %v1017 = vadd.f32 %v913, %v1016
          %v1018 = vpop.f32.mrf.mxu0
          %v1019 = vadd.f32 %v915, %v1018
          %1020 = vmatmul.bf16.gmra.mxu0 %v432
          %v1021 = vpop.f32.mrf.mxu0
          %v1022 = vadd.f32 %v918, %v1021
          %v1023 = vpop.f32.mrf.mxu0
          %v1024 = vadd.f32 %v920, %v1023
          %1025 = vmatmul.bf16.gmra.mxu0 %v434
          %v1026 = vpop.f32.mrf.mxu0
          %v1027 = vadd.f32 %v923, %v1026
          %v1028 = vpop.f32.mrf.mxu0
          %v1029 = vadd.f32 %v925, %v1028
          %1030 = vmatmul.bf16.gmra.mxu0 %v436
          %v1031 = vpop.f32.mrf.mxu0
          %v1032 = vadd.f32 %v928, %v1031
          %v1033 = vpop.f32.mrf.mxu0
          %v1034 = vadd.f32 %v930, %v1033
          %1035 = vmatmul.bf16.gmra.mxu0 %v438
          %v1036 = vpop.f32.mrf.mxu0
          %v1037 = vadd.f32 %v933, %v1036
          %v1038 = vpop.f32.mrf.mxu0
          %v1039 = vadd.f32 %v935, %v1038
          %1040 = vmatmul.bf16.gmra.mxu0 %v440
          %v1041 = vpop.f32.mrf.mxu0
          %v1042 = vadd.f32 %v938, %v1041
          %v1043 = vpop.f32.mrf.mxu0
          %v1044 = vadd.f32 %v940, %v1043
          %1045 = vmatmul.bf16.gmra.mxu0 %v442
          %v1046 = vpop.f32.mrf.mxu0
          %v1047 = vadd.f32 %v943, %v1046
          %v1048 = vpop.f32.mrf.mxu0
          %v1049 = vadd.f32 %v945, %v1048
          %1050 = vmatmul.bf16.gmra.mxu0 %v444
          %v1051 = vpop.f32.mrf.mxu0
          %v1052 = vadd.f32 %v948, %v1051
          %v1053 = vpop.f32.mrf.mxu0
          %v1054 = vadd.f32 %v950, %v1053
          %1055 = vmatmul.bf16.gmra.mxu0 %v446
          %v1056 = vpop.f32.mrf.mxu0
          %v1057 = vadd.f32 %v953, %v1056
          %v1058 = vpop.f32.mrf.mxu0
          %v1059 = vadd.f32 %v955, %v1058
          %1060 = vdwg.mxu0
          %v1061 = vmax.f32 %v759, 0.0
          %v1062 = vmax.f32 %v967, 0.0
          %v1063 = vmax.f32 %v761, 0.0
          %v1064 = vmax.f32 %v969, 0.0
          %v1065 = vmax.f32 %v764, 0.0
          %v1066 = vmax.f32 %v972, 0.0
          %v1067 = vmax.f32 %v766, 0.0
          %v1068 = vmax.f32 %v974, 0.0
          %v1069 = vmax.f32 %v769, 0.0
          %v1070 = vmax.f32 %v977, 0.0
          %v1071 = vmax.f32 %v771, 0.0
          %v1072 = vmax.f32 %v979, 0.0
          %v1073 = vmax.f32 %v774, 0.0
          %v1074 = vmax.f32 %v982, 0.0
          %v1075 = vmax.f32 %v776, 0.0
          %v1076 = vmax.f32 %v984, 0.0
          %v1077 = vmax.f32 %v779, 0.0
          %v1078 = vmax.f32 %v987, 0.0
          %v1079 = vmax.f32 %v781, 0.0
          %v1080 = vmax.f32 %v989, 0.0
          %v1081 = vmax.f32 %v784, 0.0
          %v1082 = vmax.f32 %v992, 0.0
          %v1083 = vmax.f32 %v786, 0.0
          %v1084 = vmax.f32 %v994, 0.0
          %v1085 = vmax.f32 %v789, 0.0
          %v1086 = vmax.f32 %v997, 0.0
          %v1087 = vmax.f32 %v791, 0.0
          %v1088 = vmax.f32 %v999, 0.0
          %v1089 = vmax.f32 %v794, 0.0
          %v1090 = vmax.f32 %v1002, 0.0
          %v1091 = vmax.f32 %v796, 0.0
          %v1092 = vmax.f32 %v1004, 0.0
          %v1093 = vmax.f32 %v799, 0.0
          %v1094 = vmax.f32 %v1007, 0.0
          %v1095 = vmax.f32 %v801, 0.0
          %v1096 = vmax.f32 %v1009, 0.0
          %v1097 = vmax.f32 %v804, 0.0
          %v1098 = vmax.f32 %v1012, 0.0
          %v1099 = vmax.f32 %v806, 0.0
          %v1100 = vmax.f32 %v1014, 0.0
          %v1101 = vmax.f32 %v809, 0.0
          %v1102 = vmax.f32 %v1017, 0.0
          %v1103 = vmax.f32 %v811, 0.0
          %v1104 = vmax.f32 %v1019, 0.0
          %v1105 = vmax.f32 %v814, 0.0
          %v1106 = vmax.f32 %v1022, 0.0
          %v1107 = vmax.f32 %v816, 0.0
          %v1108 = vmax.f32 %v1024, 0.0
          %v1109 = vmax.f32 %v819, 0.0
          %v1110 = vmax.f32 %v1027, 0.0
          %v1111 = vmax.f32 %v821, 0.0
          %v1112 = vmax.f32 %v1029, 0.0
          %v1113 = vmax.f32 %v824, 0.0
          %v1114 = vmax.f32 %v1032, 0.0
          %v1115 = vmax.f32 %v826, 0.0
          %v1116 = vmax.f32 %v1034, 0.0
          %v1117 = vmax.f32 %v829, 0.0
          %v1118 = vmax.f32 %v1037, 0.0
          %v1119 = vmax.f32 %v831, 0.0
          %v1120 = vmax.f32 %v1039, 0.0
          %v1121 = vmax.f32 %v834, 0.0
          %v1122 = vmax.f32 %v1042, 0.0
          %v1123 = vmax.f32 %v836, 0.0
          %v1124 = vmax.f32 %v1044, 0.0
          %v1125 = vmax.f32 %v839, 0.0
          %v1126 = vmax.f32 %v1047, 0.0
          %v1127 = vmax.f32 %v841, 0.0
          %v1128 = vmax.f32 %v1049, 0.0
          %v1129 = vmax.f32 %v844, 0.0
          %v1130 = vmax.f32 %v1052, 0.0
          %v1131 = vmax.f32 %v846, 0.0
          %v1132 = vmax.f32 %v1054, 0.0
          %v1133 = vmax.f32 %v849, 0.0
          %v1134 = vmax.f32 %v1057, 0.0
          %v1135 = vmax.f32 %v851, 0.0
          %v1136 = vmax.f32 %v1059, 0.0
          %1138 = vset.pattern.permute.xlu0 0
          %1139 = vperm.xlu0 %1138, %v371
          %v1140 = vpop.permute.xlu0 %1139
          %1143 = vset.pattern.permute.xlu0 0
          %1144 = vperm.xlu0 %1143, %v372
          %v1145 = vpop.permute.xlu0 %1144
          %1148 = vset.pattern.permute.xlu0 0
          %1149 = vperm.xlu0 %1148, %v373
          %v1150 = vpop.permute.xlu0 %1149
          %1153 = vset.pattern.permute.xlu0 0
          %1154 = vperm.xlu0 %1153, %v374
          %v1155 = vpop.permute.xlu0 %1154
          %1158 = vset.pattern.permute.xlu0 0
          %1159 = vperm.xlu0 %1158, %v375
          %v1160 = vpop.permute.xlu0 %1159
          %1163 = vset.pattern.permute.xlu0 0
          %1164 = vperm.xlu0 %1163, %v376
          %v1165 = vpop.permute.xlu0 %1164
          %1168 = vset.pattern.permute.xlu0 0
          %1169 = vperm.xlu0 %1168, %v377
          %v1170 = vpop.permute.xlu0 %1169
          %1173 = vset.pattern.permute.xlu0 0
          %1174 = vperm.xlu0 %1173, %v378
          %v1175 = vpop.permute.xlu0 %1174
          %1178 = vset.pattern.permute.xlu0 0
          %1179 = vperm.xlu0 %1178, %v379
          %v1180 = vpop.permute.xlu0 %1179
          %1183 = vset.pattern.permute.xlu0 0
          %1184 = vperm.xlu0 %1183, %v380
          %v1185 = vpop.permute.xlu0 %1184
          %1188 = vset.pattern.permute.xlu0 0
          %1189 = vperm.xlu0 %1188, %v381
          %v1190 = vpop.permute.xlu0 %1189
          %1193 = vset.pattern.permute.xlu0 0
          %1194 = vperm.xlu0 %1193, %v382
          %v1195 = vpop.permute.xlu0 %1194
          %1198 = vset.pattern.permute.xlu0 0
          %1199 = vperm.xlu0 %1198, %v383
          %v1200 = vpop.permute.xlu0 %1199
          %1203 = vset.pattern.permute.xlu0 0
          %1204 = vperm.xlu0 %1203, %v384
          %v1205 = vpop.permute.xlu0 %1204
          %1208 = vset.pattern.permute.xlu0 0
          %1209 = vperm.xlu0 %1208, %v385
          %v1210 = vpop.permute.xlu0 %1209
          %1213 = vset.pattern.permute.xlu0 0
          %1214 = vperm.xlu0 %1213, %v386
          %v1215 = vpop.permute.xlu0 %1214
          %1218 = vset.pattern.permute.xlu0 0
          %1219 = vperm.xlu0 %1218, %v387
          %v1220 = vpop.permute.xlu0 %1219
          %1223 = vset.pattern.permute.xlu0 0
          %1224 = vperm.xlu0 %1223, %v388
          %v1225 = vpop.permute.xlu0 %1224
          %1228 = vset.pattern.permute.xlu0 0
          %1229 = vperm.xlu0 %1228, %v389
          %v1230 = vpop.permute.xlu0 %1229
          %1233 = vset.pattern.permute.xlu0 0
          %1234 = vperm.xlu0 %1233, %v390
          %v1235 = vpop.permute.xlu0 %1234
          %1238 = vset.pattern.permute.xlu0 0
          %1239 = vperm.xlu0 %1238, %v391
          %v1240 = vpop.permute.xlu0 %1239
          %1243 = vset.pattern.permute.xlu0 0
          %1244 = vperm.xlu0 %1243, %v392
          %v1245 = vpop.permute.xlu0 %1244
          %1248 = vset.pattern.permute.xlu0 0
          %1249 = vperm.xlu0 %1248, %v393
          %v1250 = vpop.permute.xlu0 %1249
          %1253 = vset.pattern.permute.xlu0 0
          %1254 = vperm.xlu0 %1253, %v394
          %v1255 = vpop.permute.xlu0 %1254
          %1258 = vset.pattern.permute.xlu0 0
          %1259 = vperm.xlu0 %1258, %v395
          %v1260 = vpop.permute.xlu0 %1259
          %1263 = vset.pattern.permute.xlu0 0
          %1264 = vperm.xlu0 %1263, %v396
          %v1265 = vpop.permute.xlu0 %1264
          %1268 = vset.pattern.permute.xlu0 0
          %1269 = vperm.xlu0 %1268, %v397
          %v1270 = vpop.permute.xlu0 %1269
          %1273 = vset.pattern.permute.xlu0 0
          %1274 = vperm.xlu0 %1273, %v398
          %v1275 = vpop.permute.xlu0 %1274
          %1278 = vset.pattern.permute.xlu0 0
          %1279 = vperm.xlu0 %1278, %v399
          %v1280 = vpop.permute.xlu0 %1279
          %1283 = vset.pattern.permute.xlu0 0
          %1284 = vperm.xlu0 %1283, %v400
          %v1285 = vpop.permute.xlu0 %1284
          %1288 = vset.pattern.permute.xlu0 0
          %1289 = vperm.xlu0 %1288, %v401
          %v1290 = vpop.permute.xlu0 %1289
          %1293 = vset.pattern.permute.xlu0 0
          %1294 = vperm.xlu0 %1293, %v402
          %v1295 = vpop.permute.xlu0 %1294
          %1298 = vset.pattern.permute.xlu0 0
          %1299 = vperm.xlu0 %1298, %v403
          %v1300 = vpop.permute.xlu0 %1299
          %1303 = vset.pattern.permute.xlu0 0
          %1304 = vperm.xlu0 %1303, %v404
          %v1305 = vpop.permute.xlu0 %1304
          %1308 = vset.pattern.permute.xlu0 0
          %1309 = vperm.xlu0 %1308, %v405
          %v1310 = vpop.permute.xlu0 %1309
          %1313 = vset.pattern.permute.xlu0 0
          %1314 = vperm.xlu0 %1313, %v406
          %v1315 = vpop.permute.xlu0 %1314
          %1318 = vset.pattern.permute.xlu0 0
          %1319 = vperm.xlu0 %1318, %v407
          %v1320 = vpop.permute.xlu0 %1319
          %1323 = vset.pattern.permute.xlu0 0
          %1324 = vperm.xlu0 %1323, %v408
          %v1325 = vpop.permute.xlu0 %1324
          %v1327 = vmul.f32 %v295, %v1140
          %v1328 = vmul.f32 %v296, %v1140
          %v1329 = vmul.f32 %v297, %v1145
          %v1330 = vmul.f32 %v298, %v1145
          %v1331 = vmul.f32 %v299, %v1150
          %v1332 = vmul.f32 %v300, %v1150
          %v1333 = vmul.f32 %v301, %v1155
          %v1334 = vmul.f32 %v302, %v1155
          %v1335 = vmul.f32 %v303, %v1160
          %v1336 = vmul.f32 %v304, %v1160
          %v1337 = vmul.f32 %v305, %v1165
          %v1338 = vmul.f32 %v306, %v1165
          %v1339 = vmul.f32 %v307, %v1170
          %v1340 = vmul.f32 %v308, %v1170
          %v1341 = vmul.f32 %v309, %v1175
          %v1342 = vmul.f32 %v310, %v1175
          %v1343 = vmul.f32 %v311, %v1180
          %v1344 = vmul.f32 %v312, %v1180
          %v1345 = vmul.f32 %v313, %v1185
          %v1346 = vmul.f32 %v314, %v1185
          %v1347 = vmul.f32 %v315, %v1190
          %v1348 = vmul.f32 %v316, %v1190
          %v1349 = vmul.f32 %v317, %v1195
          %v1350 = vmul.f32 %v318, %v1195
          %v1351 = vmul.f32 %v319, %v1200
          %v1352 = vmul.f32 %v320, %v1200
          %v1353 = vmul.f32 %v321, %v1205
          %v1354 = vmul.f32 %v322, %v1205
          %v1355 = vmul.f32 %v323, %v1210
          %v1356 = vmul.f32 %v324, %v1210
          %v1357 = vmul.f32 %v325, %v1215
          %v1358 = vmul.f32 %v326, %v1215
          %v1359 = vmul.f32 %v327, %v1220
          %v1360 = vmul.f32 %v328, %v1220
          %v1361 = vmul.f32 %v329, %v1225
          %v1362 = vmul.f32 %v330, %v1225
          %v1363 = vmul.f32 %v331, %v1230
          %v1364 = vmul.f32 %v332, %v1230
          %v1365 = vmul.f32 %v333, %v1235
          %v1366 = vmul.f32 %v334, %v1235
          %v1367 = vmul.f32 %v335, %v1240
          %v1368 = vmul.f32 %v336, %v1240
          %v1369 = vmul.f32 %v337, %v1245
          %v1370 = vmul.f32 %v338, %v1245
          %v1371 = vmul.f32 %v339, %v1250
          %v1372 = vmul.f32 %v340, %v1250
          %v1373 = vmul.f32 %v341, %v1255
          %v1374 = vmul.f32 %v342, %v1255
          %v1375 = vmul.f32 %v343, %v1260
          %v1376 = vmul.f32 %v344, %v1260
          %v1377 = vmul.f32 %v345, %v1265
          %v1378 = vmul.f32 %v346, %v1265
          %v1379 = vmul.f32 %v347, %v1270
          %v1380 = vmul.f32 %v348, %v1270
          %v1381 = vmul.f32 %v349, %v1275
          %v1382 = vmul.f32 %v350, %v1275
          %v1383 = vmul.f32 %v351, %v1280
          %v1384 = vmul.f32 %v352, %v1280
          %v1385 = vmul.f32 %v353, %v1285
          %v1386 = vmul.f32 %v354, %v1285
          %v1387 = vmul.f32 %v355, %v1290
          %v1388 = vmul.f32 %v356, %v1290
          %v1389 = vmul.f32 %v357, %v1295
          %v1390 = vmul.f32 %v358, %v1295
          %v1391 = vmul.f32 %v359, %v1300
          %v1392 = vmul.f32 %v360, %v1300
          %v1393 = vmul.f32 %v361, %v1305
          %v1394 = vmul.f32 %v362, %v1305
          %v1395 = vmul.f32 %v363, %v1310
          %v1396 = vmul.f32 %v364, %v1310
          %v1397 = vmul.f32 %v365, %v1315
          %v1398 = vmul.f32 %v366, %v1315
          %v1399 = vmul.f32 %v367, %v1320
          %v1400 = vmul.f32 %v368, %v1320
          %v1401 = vmul.f32 %v369, %v1325
          %v1402 = vmul.f32 %v370, %v1325
          %1403 = vset.pattern.permute.xlu0 1
          %1404 = vperm.xlu0 %1403, %v371
          %v1405 = vpop.permute.xlu0 %1404
          %1407 = vset.pattern.permute.xlu0 1
          %1408 = vperm.xlu0 %1407, %v372
          %v1409 = vpop.permute.xlu0 %1408
          %1411 = vset.pattern.permute.xlu0 1
          %1412 = vperm.xlu0 %1411, %v373
          %v1413 = vpop.permute.xlu0 %1412
          %1415 = vset.pattern.permute.xlu0 1
          %1416 = vperm.xlu0 %1415, %v374
          %v1417 = vpop.permute.xlu0 %1416
          %1419 = vset.pattern.permute.xlu0 1
          %1420 = vperm.xlu0 %1419, %v375
          %v1421 = vpop.permute.xlu0 %1420
          %1423 = vset.pattern.permute.xlu0 1
          %1424 = vperm.xlu0 %1423, %v376
          %v1425 = vpop.permute.xlu0 %1424
          %1427 = vset.pattern.permute.xlu0 1
          %1428 = vperm.xlu0 %1427, %v377
          %v1429 = vpop.permute.xlu0 %1428
          %1431 = vset.pattern.permute.xlu0 1
          %1432 = vperm.xlu0 %1431, %v378
          %v1433 = vpop.permute.xlu0 %1432
          %1435 = vset.pattern.permute.xlu0 1
          %1436 = vperm.xlu0 %1435, %v379
          %v1437 = vpop.permute.xlu0 %1436
          %1439 = vset.pattern.permute.xlu0 1
          %1440 = vperm.xlu0 %1439, %v380
          %v1441 = vpop.permute.xlu0 %1440
          %1443 = vset.pattern.permute.xlu0 1
          %1444 = vperm.xlu0 %1443, %v381
          %v1445 = vpop.permute.xlu0 %1444
          %1447 = vset.pattern.permute.xlu0 1
          %1448 = vperm.xlu0 %1447, %v382
          %v1449 = vpop.permute.xlu0 %1448
          %1451 = vset.pattern.permute.xlu0 1
          %1452 = vperm.xlu0 %1451, %v383
          %v1453 = vpop.permute.xlu0 %1452
          %1455 = vset.pattern.permute.xlu0 1
          %1456 = vperm.xlu0 %1455, %v384
          %v1457 = vpop.permute.xlu0 %1456
          %1459 = vset.pattern.permute.xlu0 1
          %1460 = vperm.xlu0 %1459, %v385
          %v1461 = vpop.permute.xlu0 %1460
          %1463 = vset.pattern.permute.xlu0 1
          %1464 = vperm.xlu0 %1463, %v386
          %v1465 = vpop.permute.xlu0 %1464
          %1467 = vset.pattern.permute.xlu0 1
          %1468 = vperm.xlu0 %1467, %v387
          %v1469 = vpop.permute.xlu0 %1468
          %1471 = vset.pattern.permute.xlu0 1
          %1472 = vperm.xlu0 %1471, %v388
          %v1473 = vpop.permute.xlu0 %1472
          %1475 = vset.pattern.permute.xlu0 1
          %1476 = vperm.xlu0 %1475, %v389
          %v1477 = vpop.permute.xlu0 %1476
          %1479 = vset.pattern.permute.xlu0 1
          %1480 = vperm.xlu0 %1479, %v390
          %v1481 = vpop.permute.xlu0 %1480
          %1483 = vset.pattern.permute.xlu0 1
          %1484 = vperm.xlu0 %1483, %v391
          %v1485 = vpop.permute.xlu0 %1484
          %1487 = vset.pattern.permute.xlu0 1
          %1488 = vperm.xlu0 %1487, %v392
          %v1489 = vpop.permute.xlu0 %1488
          %1491 = vset.pattern.permute.xlu0 1
          %1492 = vperm.xlu0 %1491, %v393
          %v1493 = vpop.permute.xlu0 %1492
          %1495 = vset.pattern.permute.xlu0 1
          %1496 = vperm.xlu0 %1495, %v394
          %v1497 = vpop.permute.xlu0 %1496
          %1499 = vset.pattern.permute.xlu0 1
          %1500 = vperm.xlu0 %1499, %v395
          %v1501 = vpop.permute.xlu0 %1500
          %1503 = vset.pattern.permute.xlu0 1
          %1504 = vperm.xlu0 %1503, %v396
          %v1505 = vpop.permute.xlu0 %1504
          %1507 = vset.pattern.permute.xlu0 1
          %1508 = vperm.xlu0 %1507, %v397
          %v1509 = vpop.permute.xlu0 %1508
          %1511 = vset.pattern.permute.xlu0 1
          %1512 = vperm.xlu0 %1511, %v398
          %v1513 = vpop.permute.xlu0 %1512
          %1515 = vset.pattern.permute.xlu0 1
          %1516 = vperm.xlu0 %1515, %v399
          %v1517 = vpop.permute.xlu0 %1516
          %1519 = vset.pattern.permute.xlu0 1
          %1520 = vperm.xlu0 %1519, %v400
          %v1521 = vpop.permute.xlu0 %1520
          %1523 = vset.pattern.permute.xlu0 1
          %1524 = vperm.xlu0 %1523, %v401
          %v1525 = vpop.permute.xlu0 %1524
          %1527 = vset.pattern.permute.xlu0 1
          %1528 = vperm.xlu0 %1527, %v402
          %v1529 = vpop.permute.xlu0 %1528
          %1531 = vset.pattern.permute.xlu0 1
          %1532 = vperm.xlu0 %1531, %v403
          %v1533 = vpop.permute.xlu0 %1532
          %1535 = vset.pattern.permute.xlu0 1
          %1536 = vperm.xlu0 %1535, %v404
          %v1537 = vpop.permute.xlu0 %1536
          %1539 = vset.pattern.permute.xlu0 1
          %1540 = vperm.xlu0 %1539, %v405
          %v1541 = vpop.permute.xlu0 %1540
          %1543 = vset.pattern.permute.xlu0 1
          %1544 = vperm.xlu0 %1543, %v406
          %v1545 = vpop.permute.xlu0 %1544
          %1547 = vset.pattern.permute.xlu0 1
          %1548 = vperm.xlu0 %1547, %v407
          %v1549 = vpop.permute.xlu0 %1548
          %1551 = vset.pattern.permute.xlu0 1
          %1552 = vperm.xlu0 %1551, %v408
          %v1553 = vpop.permute.xlu0 %1552
          %v1555 = vmul.f32 %v1061, %v1405
          %v1556 = vmul.f32 %v1062, %v1405
          %v1557 = vmul.f32 %v1063, %v1409
          %v1558 = vmul.f32 %v1064, %v1409
          %v1559 = vmul.f32 %v1065, %v1413
          %v1560 = vmul.f32 %v1066, %v1413
          %v1561 = vmul.f32 %v1067, %v1417
          %v1562 = vmul.f32 %v1068, %v1417
          %v1563 = vmul.f32 %v1069, %v1421
          %v1564 = vmul.f32 %v1070, %v1421
          %v1565 = vmul.f32 %v1071, %v1425
          %v1566 = vmul.f32 %v1072, %v1425
          %v1567 = vmul.f32 %v1073, %v1429
          %v1568 = vmul.f32 %v1074, %v1429
          %v1569 = vmul.f32 %v1075, %v1433
          %v1570 = vmul.f32 %v1076, %v1433
          %v1571 = vmul.f32 %v1077, %v1437
          %v1572 = vmul.f32 %v1078, %v1437
          %v1573 = vmul.f32 %v1079, %v1441
          %v1574 = vmul.f32 %v1080, %v1441
          %v1575 = vmul.f32 %v1081, %v1445
          %v1576 = vmul.f32 %v1082, %v1445
          %v1577 = vmul.f32 %v1083, %v1449
          %v1578 = vmul.f32 %v1084, %v1449
          %v1579 = vmul.f32 %v1085, %v1453
          %v1580 = vmul.f32 %v1086, %v1453
          %v1581 = vmul.f32 %v1087, %v1457
          %v1582 = vmul.f32 %v1088, %v1457
          %v1583 = vmul.f32 %v1089, %v1461
          %v1584 = vmul.f32 %v1090, %v1461
          %v1585 = vmul.f32 %v1091, %v1465
          %v1586 = vmul.f32 %v1092, %v1465
          %v1587 = vmul.f32 %v1093, %v1469
          %v1588 = vmul.f32 %v1094, %v1469
          %v1589 = vmul.f32 %v1095, %v1473
          %v1590 = vmul.f32 %v1096, %v1473
          %v1591 = vmul.f32 %v1097, %v1477
          %v1592 = vmul.f32 %v1098, %v1477
          %v1593 = vmul.f32 %v1099, %v1481
          %v1594 = vmul.f32 %v1100, %v1481
          %v1595 = vmul.f32 %v1101, %v1485
          %v1596 = vmul.f32 %v1102, %v1485
          %v1597 = vmul.f32 %v1103, %v1489
          %v1598 = vmul.f32 %v1104, %v1489
          %v1599 = vmul.f32 %v1105, %v1493
          %v1600 = vmul.f32 %v1106, %v1493
          %v1601 = vmul.f32 %v1107, %v1497
          %v1602 = vmul.f32 %v1108, %v1497
          %v1603 = vmul.f32 %v1109, %v1501
          %v1604 = vmul.f32 %v1110, %v1501
          %v1605 = vmul.f32 %v1111, %v1505
          %v1606 = vmul.f32 %v1112, %v1505
          %v1607 = vmul.f32 %v1113, %v1509
          %v1608 = vmul.f32 %v1114, %v1509
          %v1609 = vmul.f32 %v1115, %v1513
          %v1610 = vmul.f32 %v1116, %v1513
          %v1611 = vmul.f32 %v1117, %v1517
          %v1612 = vmul.f32 %v1118, %v1517
          %v1613 = vmul.f32 %v1119, %v1521
          %v1614 = vmul.f32 %v1120, %v1521
          %v1615 = vmul.f32 %v1121, %v1525
          %v1616 = vmul.f32 %v1122, %v1525
          %v1617 = vmul.f32 %v1123, %v1529
          %v1618 = vmul.f32 %v1124, %v1529
          %v1619 = vmul.f32 %v1125, %v1533
          %v1620 = vmul.f32 %v1126, %v1533
          %v1621 = vmul.f32 %v1127, %v1537
          %v1622 = vmul.f32 %v1128, %v1537
          %v1623 = vmul.f32 %v1129, %v1541
          %v1624 = vmul.f32 %v1130, %v1541
          %v1625 = vmul.f32 %v1131, %v1545
          %v1626 = vmul.f32 %v1132, %v1545
          %v1627 = vmul.f32 %v1133, %v1549
          %v1628 = vmul.f32 %v1134, %v1549
          %v1629 = vmul.f32 %v1135, %v1553
          %v1630 = vmul.f32 %v1136, %v1553
          %v1631 = vadd.f32 %v1327, %v1555
          %v1632 = vadd.f32 %v1328, %v1556
          %v1633 = vadd.f32 %v1329, %v1557
          %v1634 = vadd.f32 %v1330, %v1558
          %v1635 = vadd.f32 %v1331, %v1559
          %v1636 = vadd.f32 %v1332, %v1560
          %v1637 = vadd.f32 %v1333, %v1561
          %v1638 = vadd.f32 %v1334, %v1562
          %v1639 = vadd.f32 %v1335, %v1563
          %v1640 = vadd.f32 %v1336, %v1564
          %v1641 = vadd.f32 %v1337, %v1565
          %v1642 = vadd.f32 %v1338, %v1566
          %v1643 = vadd.f32 %v1339, %v1567
          %v1644 = vadd.f32 %v1340, %v1568
          %v1645 = vadd.f32 %v1341, %v1569
          %v1646 = vadd.f32 %v1342, %v1570
          %v1647 = vadd.f32 %v1343, %v1571
          %v1648 = vadd.f32 %v1344, %v1572
          %v1649 = vadd.f32 %v1345, %v1573
          %v1650 = vadd.f32 %v1346, %v1574
          %v1651 = vadd.f32 %v1347, %v1575
          %v1652 = vadd.f32 %v1348, %v1576
          %v1653 = vadd.f32 %v1349, %v1577
          %v1654 = vadd.f32 %v1350, %v1578
          %v1655 = vadd.f32 %v1351, %v1579
          %v1656 = vadd.f32 %v1352, %v1580
          %v1657 = vadd.f32 %v1353, %v1581
          %v1658 = vadd.f32 %v1354, %v1582
          %v1659 = vadd.f32 %v1355, %v1583
          %v1660 = vadd.f32 %v1356, %v1584
          %v1661 = vadd.f32 %v1357, %v1585
          %v1662 = vadd.f32 %v1358, %v1586
          %v1663 = vadd.f32 %v1359, %v1587
          %v1664 = vadd.f32 %v1360, %v1588
          %v1665 = vadd.f32 %v1361, %v1589
          %v1666 = vadd.f32 %v1362, %v1590
          %v1667 = vadd.f32 %v1363, %v1591
          %v1668 = vadd.f32 %v1364, %v1592
          %v1669 = vadd.f32 %v1365, %v1593
          %v1670 = vadd.f32 %v1366, %v1594
          %v1671 = vadd.f32 %v1367, %v1595
          %v1672 = vadd.f32 %v1368, %v1596
          %v1673 = vadd.f32 %v1369, %v1597
          %v1674 = vadd.f32 %v1370, %v1598
          %v1675 = vadd.f32 %v1371, %v1599
          %v1676 = vadd.f32 %v1372, %v1600
          %v1677 = vadd.f32 %v1373, %v1601
          %v1678 = vadd.f32 %v1374, %v1602
          %v1679 = vadd.f32 %v1375, %v1603
          %v1680 = vadd.f32 %v1376, %v1604
          %v1681 = vadd.f32 %v1377, %v1605
          %v1682 = vadd.f32 %v1378, %v1606
          %v1683 = vadd.f32 %v1379, %v1607
          %v1684 = vadd.f32 %v1380, %v1608
          %v1685 = vadd.f32 %v1381, %v1609
          %v1686 = vadd.f32 %v1382, %v1610
          %v1687 = vadd.f32 %v1383, %v1611
          %v1688 = vadd.f32 %v1384, %v1612
          %v1689 = vadd.f32 %v1385, %v1613
          %v1690 = vadd.f32 %v1386, %v1614
          %v1691 = vadd.f32 %v1387, %v1615
          %v1692 = vadd.f32 %v1388, %v1616
          %v1693 = vadd.f32 %v1389, %v1617
          %v1694 = vadd.f32 %v1390, %v1618
          %v1695 = vadd.f32 %v1391, %v1619
          %v1696 = vadd.f32 %v1392, %v1620
          %v1697 = vadd.f32 %v1393, %v1621
          %v1698 = vadd.f32 %v1394, %v1622
          %v1699 = vadd.f32 %v1395, %v1623
          %v1700 = vadd.f32 %v1396, %v1624
          %v1701 = vadd.f32 %v1397, %v1625
          %v1702 = vadd.f32 %v1398, %v1626
          %v1703 = vadd.f32 %v1399, %v1627
          %v1704 = vadd.f32 %v1400, %v1628
          %v1705 = vadd.f32 %v1401, %v1629
          %v1706 = vadd.f32 %v1402, %v1630
          %1707 = vst [vmem:[%s263] sm:$0xff] %v1631
          %1708 = vst [vmem:[%s263 + $0x8] sm:$0xff] %v1632
          %1709 = vst [vmem:[%s263 + $0x10] sm:$0xff] %v1633
          %1710 = vst [vmem:[%s263 + $0x18] sm:$0xff] %v1634
          %1711 = vst [vmem:[%s263 + $0x20] sm:$0xff] %v1635
          %1712 = vst [vmem:[%s263 + $0x28] sm:$0xff] %v1636
          %1713 = vst [vmem:[%s263 + $0x30] sm:$0xff] %v1637
          %1714 = vst [vmem:[%s263 + $0x38] sm:$0xff] %v1638
          %1715 = vst [vmem:[%s263 + $0x40] sm:$0xff] %v1639
          %1716 = vst [vmem:[%s263 + $0x48] sm:$0xff] %v1640
          %1717 = vst [vmem:[%s263 + $0x50] sm:$0xff] %v1641
          %1718 = vst [vmem:[%s263 + $0x58] sm:$0xff] %v1642
          %1719 = vst [vmem:[%s263 + $0x60] sm:$0xff] %v1643
          %1720 = vst [vmem:[%s263 + $0x68] sm:$0xff] %v1644
          %1721 = vst [vmem:[%s263 + $0x70] sm:$0xff] %v1645
          %1722 = vst [vmem:[%s263 + $0x78] sm:$0xff] %v1646
          %1723 = vst [vmem:[%s263 + $0x80] sm:$0xff] %v1647
          %1724 = vst [vmem:[%s263 + $0x88] sm:$0xff] %v1648
          %1725 = vst [vmem:[%s263 + $0x90] sm:$0xff] %v1649
          %1726 = vst [vmem:[%s263 + $0x98] sm:$0xff] %v1650
          %1727 = vst [vmem:[%s263 + $0xa0] sm:$0xff] %v1651
          %1728 = vst [vmem:[%s263 + $0xa8] sm:$0xff] %v1652
          %1729 = vst [vmem:[%s263 + $0xb0] sm:$0xff] %v1653
          %1730 = vst [vmem:[%s263 + $0xb8] sm:$0xff] %v1654
          %1731 = vst [vmem:[%s263 + $0xc0] sm:$0xff] %v1655
          %1732 = vst [vmem:[%s263 + $0xc8] sm:$0xff] %v1656
          %1733 = vst [vmem:[%s263 + $0xd0] sm:$0xff] %v1657
          %1734 = vst [vmem:[%s263 + $0xd8] sm:$0xff] %v1658
          %1735 = vst [vmem:[%s263 + $0xe0] sm:$0xff] %v1659
          %1736 = vst [vmem:[%s263 + $0xe8] sm:$0xff] %v1660
          %1737 = vst [vmem:[%s263 + $0xf0] sm:$0xff] %v1661
          %1738 = vst [vmem:[%s263 + $0xf8] sm:$0xff] %v1662
          %1739 = vst [vmem:[%s263 + $0x100] sm:$0xff] %v1663
          %1740 = vst [vmem:[%s263 + $0x108] sm:$0xff] %v1664
          %1741 = vst [vmem:[%s263 + $0x110] sm:$0xff] %v1665
          %1742 = vst [vmem:[%s263 + $0x118] sm:$0xff] %v1666
          %1743 = vst [vmem:[%s263 + $0x120] sm:$0xff] %v1667
          %1744 = vst [vmem:[%s263 + $0x128] sm:$0xff] %v1668
          %1745 = vst [vmem:[%s263 + $0x130] sm:$0xff] %v1669
          %1746 = vst [vmem:[%s263 + $0x138] sm:$0xff] %v1670
          %1747 = vst [vmem:[%s263 + $0x140] sm:$0xff] %v1671
          %1748 = vst [vmem:[%s263 + $0x148] sm:$0xff] %v1672
          %1749 = vst [vmem:[%s263 + $0x150] sm:$0xff] %v1673
          %1750 = vst [vmem:[%s263 + $0x158] sm:$0xff] %v1674
          %1751 = vst [vmem:[%s263 + $0x160] sm:$0xff] %v1675
          %1752 = vst [vmem:[%s263 + $0x168] sm:$0xff] %v1676
          %1753 = vst [vmem:[%s263 + $0x170] sm:$0xff] %v1677
          %1754 = vst [vmem:[%s263 + $0x178] sm:$0xff] %v1678
          %1755 = vst [vmem:[%s263 + $0x180] sm:$0xff] %v1679
          %1756 = vst [vmem:[%s263 + $0x188] sm:$0xff] %v1680
          %1757 = vst [vmem:[%s263 + $0x190] sm:$0xff] %v1681
          %1758 = vst [vmem:[%s263 + $0x198] sm:$0xff] %v1682
          %1759 = vst [vmem:[%s263 + $0x1a0] sm:$0xff] %v1683
          %1760 = vst [vmem:[%s263 + $0x1a8] sm:$0xff] %v1684
          %1761 = vst [vmem:[%s263 + $0x1b0] sm:$0xff] %v1685
          %1762 = vst [vmem:[%s263 + $0x1b8] sm:$0xff] %v1686
          %1763 = vst [vmem:[%s263 + $0x1c0] sm:$0xff] %v1687
          %1764 = vst [vmem:[%s263 + $0x1c8] sm:$0xff] %v1688
          %1765 = vst [vmem:[%s263 + $0x1d0] sm:$0xff] %v1689
          %1766 = vst [vmem:[%s263 + $0x1d8] sm:$0xff] %v1690
          %1767 = vst [vmem:[%s263 + $0x1e0] sm:$0xff] %v1691
          %1768 = vst [vmem:[%s263 + $0x1e8] sm:$0xff] %v1692
          %1769 = vst [vmem:[%s263 + $0x1f0] sm:$0xff] %v1693
          %1770 = vst [vmem:[%s263 + $0x1f8] sm:$0xff] %v1694
          %1771 = vst [vmem:[%s263 + $0x200] sm:$0xff] %v1695
          %1772 = vst [vmem:[%s263 + $0x208] sm:$0xff] %v1696
          %1773 = vst [vmem:[%s263 + $0x210] sm:$0xff] %v1697
          %1774 = vst [vmem:[%s263 + $0x218] sm:$0xff] %v1698
          %1775 = vst [vmem:[%s263 + $0x220] sm:$0xff] %v1699
          %1776 = vst [vmem:[%s263 + $0x228] sm:$0xff] %v1700
          %1777 = vst [vmem:[%s263 + $0x230] sm:$0xff] %v1701
          %1778 = vst [vmem:[%s263 + $0x238] sm:$0xff] %v1702
          %1779 = vst [vmem:[%s263 + $0x240] sm:$0xff] %v1703
          %1780 = vst [vmem:[%s263 + $0x248] sm:$0xff] %v1704
          %1781 = vst [vmem:[%s263 + $0x250] sm:$0xff] %v1705
          %1782 = vst [vmem:[%s263 + $0x258] sm:$0xff] %v1706
        $region44: #{tpu_custom_call.1} parent=35 // pred_fallthru
          _
        %s1783 = sld [smem:[#allocation3 + %s30]]
        %p1784 = scmp.eq.s32.totalorder %s1783, 0
        // Predicated region
        $region45: #{tpu_custom_call.1} parent=35 // pred_check
          %p1785 = pneg %p1784
        $region46: #{tpu_custom_call.1} parent=35 // pred_check_branch
          %1787 = sbr.rel (%p1785) target = $region48
        $region47: #{tpu_custom_call.1} parent=35 // pred_region
          %v1788 = vld [vmem:[%s229] sm:$0xff]
          %v1789 = vld [vmem:[%s229 + $0x8] sm:$0xff]
          %v1790 = vld [vmem:[%s229 + $0x10] sm:$0xff]
          %v1791 = vld [vmem:[%s229 + $0x18] sm:$0xff]
          %v1792 = vld [vmem:[%s229 + $0x20] sm:$0xff]
          %v1793 = vld [vmem:[%s229 + $0x28] sm:$0xff]
          %v1794 = vld [vmem:[%s229 + $0x30] sm:$0xff]
          %v1795 = vld [vmem:[%s229 + $0x38] sm:$0xff]
          %v1796 = vld [vmem:[%s229 + $0x40] sm:$0xff]
          %v1797 = vld [vmem:[%s229 + $0x48] sm:$0xff]
          %v1798 = vld [vmem:[%s229 + $0x50] sm:$0xff]
          %v1799 = vld [vmem:[%s229 + $0x58] sm:$0xff]
          %v1800 = vld [vmem:[%s229 + $0x60] sm:$0xff]
          %v1801 = vld [vmem:[%s229 + $0x68] sm:$0xff]
          %v1802 = vld [vmem:[%s229 + $0x70] sm:$0xff]
          %v1803 = vld [vmem:[%s229 + $0x78] sm:$0xff]
          %v1804 = vld [vmem:[%s229 + $0x80] sm:$0xff]
          %v1805 = vld [vmem:[%s229 + $0x88] sm:$0xff]
          %v1806 = vld [vmem:[%s229 + $0x90] sm:$0xff]
          %v1807 = vld [vmem:[%s229 + $0x98] sm:$0xff]
          %v1808 = vld [vmem:[%s229 + $0xa0] sm:$0xff]
          %v1809 = vld [vmem:[%s229 + $0xa8] sm:$0xff]
          %v1810 = vld [vmem:[%s229 + $0xb0] sm:$0xff]
          %v1811 = vld [vmem:[%s229 + $0xb8] sm:$0xff]
          %v1812 = vld [vmem:[%s229 + $0xc0] sm:$0xff]
          %v1813 = vld [vmem:[%s229 + $0xc8] sm:$0xff]
          %v1814 = vld [vmem:[%s229 + $0xd0] sm:$0xff]
          %v1815 = vld [vmem:[%s229 + $0xd8] sm:$0xff]
          %v1816 = vld [vmem:[%s229 + $0xe0] sm:$0xff]
          %v1817 = vld [vmem:[%s229 + $0xe8] sm:$0xff]
          %v1818 = vld [vmem:[%s229 + $0xf0] sm:$0xff]
          %v1819 = vld [vmem:[%s229 + $0xf8] sm:$0xff]
          %v1820 = vld [vmem:[%s229 + $0x100] sm:$0xff]
          %v1821 = vld [vmem:[%s229 + $0x108] sm:$0xff]
          %v1822 = vld [vmem:[%s229 + $0x110] sm:$0xff]
          %v1823 = vld [vmem:[%s229 + $0x118] sm:$0xff]
          %v1824 = vld [vmem:[%s229 + $0x120] sm:$0xff]
          %v1825 = vld [vmem:[%s229 + $0x128] sm:$0xff]
          %v1826 = vld [vmem:[%s229 + $0x130] sm:$0xff]
          %v1827 = vld [vmem:[%s229 + $0x138] sm:$0xff]
          %v1828 = vld [vmem:[%s229 + $0x140] sm:$0xff]
          %v1829 = vld [vmem:[%s229 + $0x148] sm:$0xff]
          %v1830 = vld [vmem:[%s229 + $0x150] sm:$0xff]
          %v1831 = vld [vmem:[%s229 + $0x158] sm:$0xff]
          %v1832 = vld [vmem:[%s229 + $0x160] sm:$0xff]
          %v1833 = vld [vmem:[%s229 + $0x168] sm:$0xff]
          %v1834 = vld [vmem:[%s229 + $0x170] sm:$0xff]
          %v1835 = vld [vmem:[%s229 + $0x178] sm:$0xff]
          %v1836 = vld [vmem:[%s229 + $0x180] sm:$0xff]
          %v1837 = vld [vmem:[%s229 + $0x188] sm:$0xff]
          %v1838 = vld [vmem:[%s229 + $0x190] sm:$0xff]
          %v1839 = vld [vmem:[%s229 + $0x198] sm:$0xff]
          %v1840 = vld [vmem:[%s229 + $0x1a0] sm:$0xff]
          %v1841 = vld [vmem:[%s229 + $0x1a8] sm:$0xff]
          %v1842 = vld [vmem:[%s229 + $0x1b0] sm:$0xff]
          %v1843 = vld [vmem:[%s229 + $0x1b8] sm:$0xff]
          %v1844 = vld [vmem:[%s229 + $0x1c0] sm:$0xff]
          %v1845 = vld [vmem:[%s229 + $0x1c8] sm:$0xff]
          %v1846 = vld [vmem:[%s229 + $0x1d0] sm:$0xff]
          %v1847 = vld [vmem:[%s229 + $0x1d8] sm:$0xff]
          %v1848 = vld [vmem:[%s229 + $0x1e0] sm:$0xff]
          %v1849 = vld [vmem:[%s229 + $0x1e8] sm:$0xff]
          %v1850 = vld [vmem:[%s229 + $0x1f0] sm:$0xff]
          %v1851 = vld [vmem:[%s229 + $0x1f8] sm:$0xff]
          %v1852 = vld [vmem:[%s229 + $0x200] sm:$0xff]
          %v1853 = vld [vmem:[%s229 + $0x208] sm:$0xff]
          %v1854 = vld [vmem:[%s229 + $0x210] sm:$0xff]
          %v1855 = vld [vmem:[%s229 + $0x218] sm:$0xff]
          %v1856 = vld [vmem:[%s229 + $0x220] sm:$0xff]
          %v1857 = vld [vmem:[%s229 + $0x228] sm:$0xff]
          %v1858 = vld [vmem:[%s229 + $0x230] sm:$0xff]
          %v1859 = vld [vmem:[%s229 + $0x238] sm:$0xff]
          %v1860 = vld [vmem:[%s229 + $0x240] sm:$0xff]
          %v1861 = vld [vmem:[%s229 + $0x248] sm:$0xff]
          %v1862 = vld [vmem:[%s229 + $0x250] sm:$0xff]
          %v1863 = vld [vmem:[%s229 + $0x258] sm:$0xff]
          %v1864 = vld [vmem:[%s278] sm:$0xff]
          %v1865 = vld [vmem:[%s278 + $0x8] sm:$0xff]
          %v1866 = vld [vmem:[%s278 + $0x10] sm:$0xff]
          %v1867 = vld [vmem:[%s278 + $0x18] sm:$0xff]
          %v1868 = vld [vmem:[%s278 + $0x20] sm:$0xff]
          %v1869 = vld [vmem:[%s278 + $0x28] sm:$0xff]
          %v1870 = vld [vmem:[%s278 + $0x30] sm:$0xff]
          %v1871 = vld [vmem:[%s278 + $0x38] sm:$0xff]
          %v1872 = vld [vmem:[%s278 + $0x40] sm:$0xff]
          %v1873 = vld [vmem:[%s278 + $0x48] sm:$0xff]
          %v1874 = vld [vmem:[%s278 + $0x50] sm:$0xff]
          %v1875 = vld [vmem:[%s278 + $0x58] sm:$0xff]
          %v1876 = vld [vmem:[%s278 + $0x60] sm:$0xff]
          %v1877 = vld [vmem:[%s278 + $0x68] sm:$0xff]
          %v1878 = vld [vmem:[%s278 + $0x70] sm:$0xff]
          %v1879 = vld [vmem:[%s278 + $0x78] sm:$0xff]
          %v1880 = vld [vmem:[%s278 + $0x80] sm:$0xff]
          %v1881 = vld [vmem:[%s278 + $0x88] sm:$0xff]
          %v1882 = vld [vmem:[%s278 + $0x90] sm:$0xff]
          %v1883 = vld [vmem:[%s278 + $0x98] sm:$0xff]
          %v1884 = vld [vmem:[%s278 + $0xa0] sm:$0xff]
          %v1885 = vld [vmem:[%s278 + $0xa8] sm:$0xff]
          %v1886 = vld [vmem:[%s278 + $0xb0] sm:$0xff]
          %v1887 = vld [vmem:[%s278 + $0xb8] sm:$0xff]
          %v1888 = vld [vmem:[%s278 + $0xc0] sm:$0xff]
          %v1889 = vld [vmem:[%s278 + $0xc8] sm:$0xff]
          %v1890 = vld [vmem:[%s278 + $0xd0] sm:$0xff]
          %v1891 = vld [vmem:[%s278 + $0xd8] sm:$0xff]
          %v1892 = vld [vmem:[%s278 + $0xe0] sm:$0xff]
          %v1893 = vld [vmem:[%s278 + $0xe8] sm:$0xff]
          %v1894 = vld [vmem:[%s278 + $0xf0] sm:$0xff]
          %v1895 = vld [vmem:[%s278 + $0xf8] sm:$0xff]
          %v1896 = vld [vmem:[%s278 + $0x100] sm:$0xff]
          %v1897 = vld [vmem:[%s278 + $0x108] sm:$0xff]
          %v1898 = vld [vmem:[%s278 + $0x110] sm:$0xff]
          %v1899 = vld [vmem:[%s278 + $0x118] sm:$0xff]
          %v1900 = vld [vmem:[%s278 + $0x120] sm:$0xff]
          %v1901 = vld [vmem:[%s278 + $0x128] sm:$0xff]
          %1903 = vset.pattern.permute.xlu0 0
          %1904 = vperm.xlu0 %1903, %v1864
          %v1905 = vpop.permute.xlu0 %1904
          %1908 = vset.pattern.permute.xlu0 0
          %1909 = vperm.xlu0 %1908, %v1865
          %v1910 = vpop.permute.xlu0 %1909
          %1913 = vset.pattern.permute.xlu0 0
          %1914 = vperm.xlu0 %1913, %v1866
          %v1915 = vpop.permute.xlu0 %1914
          %1918 = vset.pattern.permute.xlu0 0
          %1919 = vperm.xlu0 %1918, %v1867
          %v1920 = vpop.permute.xlu0 %1919
          %1923 = vset.pattern.permute.xlu0 0
          %1924 = vperm.xlu0 %1923, %v1868
          %v1925 = vpop.permute.xlu0 %1924
          %1928 = vset.pattern.permute.xlu0 0
          %1929 = vperm.xlu0 %1928, %v1869
          %v1930 = vpop.permute.xlu0 %1929
          %1933 = vset.pattern.permute.xlu0 0
          %1934 = vperm.xlu0 %1933, %v1870
          %v1935 = vpop.permute.xlu0 %1934
          %1938 = vset.pattern.permute.xlu0 0
          %1939 = vperm.xlu0 %1938, %v1871
          %v1940 = vpop.permute.xlu0 %1939
          %1943 = vset.pattern.permute.xlu0 0
          %1944 = vperm.xlu0 %1943, %v1872
          %v1945 = vpop.permute.xlu0 %1944
          %1948 = vset.pattern.permute.xlu0 0
          %1949 = vperm.xlu0 %1948, %v1873
          %v1950 = vpop.permute.xlu0 %1949
          %1953 = vset.pattern.permute.xlu0 0
          %1954 = vperm.xlu0 %1953, %v1874
          %v1955 = vpop.permute.xlu0 %1954
          %1958 = vset.pattern.permute.xlu0 0
          %1959 = vperm.xlu0 %1958, %v1875
          %v1960 = vpop.permute.xlu0 %1959
          %1963 = vset.pattern.permute.xlu0 0
          %1964 = vperm.xlu0 %1963, %v1876
          %v1965 = vpop.permute.xlu0 %1964
          %1968 = vset.pattern.permute.xlu0 0
          %1969 = vperm.xlu0 %1968, %v1877
          %v1970 = vpop.permute.xlu0 %1969
          %1973 = vset.pattern.permute.xlu0 0
          %1974 = vperm.xlu0 %1973, %v1878
          %v1975 = vpop.permute.xlu0 %1974
          %1978 = vset.pattern.permute.xlu0 0
          %1979 = vperm.xlu0 %1978, %v1879
          %v1980 = vpop.permute.xlu0 %1979
          %1983 = vset.pattern.permute.xlu0 0
          %1984 = vperm.xlu0 %1983, %v1880
          %v1985 = vpop.permute.xlu0 %1984
          %1988 = vset.pattern.permute.xlu0 0
          %1989 = vperm.xlu0 %1988, %v1881
          %v1990 = vpop.permute.xlu0 %1989
          %1993 = vset.pattern.permute.xlu0 0
          %1994 = vperm.xlu0 %1993, %v1882
          %v1995 = vpop.permute.xlu0 %1994
          %1998 = vset.pattern.permute.xlu0 0
          %1999 = vperm.xlu0 %1998, %v1883
          %v2000 = vpop.permute.xlu0 %1999
          %2003 = vset.pattern.permute.xlu0 0
          %2004 = vperm.xlu0 %2003, %v1884
          %v2005 = vpop.permute.xlu0 %2004
          %2008 = vset.pattern.permute.xlu0 0
          %2009 = vperm.xlu0 %2008, %v1885
          %v2010 = vpop.permute.xlu0 %2009
          %2013 = vset.pattern.permute.xlu0 0
          %2014 = vperm.xlu0 %2013, %v1886
          %v2015 = vpop.permute.xlu0 %2014
          %2018 = vset.pattern.permute.xlu0 0
          %2019 = vperm.xlu0 %2018, %v1887
          %v2020 = vpop.permute.xlu0 %2019
          %2023 = vset.pattern.permute.xlu0 0
          %2024 = vperm.xlu0 %2023, %v1888
          %v2025 = vpop.permute.xlu0 %2024
          %2028 = vset.pattern.permute.xlu0 0
          %2029 = vperm.xlu0 %2028, %v1889
          %v2030 = vpop.permute.xlu0 %2029
          %2033 = vset.pattern.permute.xlu0 0
          %2034 = vperm.xlu0 %2033, %v1890
          %v2035 = vpop.permute.xlu0 %2034
          %2038 = vset.pattern.permute.xlu0 0
          %2039 = vperm.xlu0 %2038, %v1891
          %v2040 = vpop.permute.xlu0 %2039
          %2043 = vset.pattern.permute.xlu0 0
          %2044 = vperm.xlu0 %2043, %v1892
          %v2045 = vpop.permute.xlu0 %2044
          %2048 = vset.pattern.permute.xlu0 0
          %2049 = vperm.xlu0 %2048, %v1893
          %v2050 = vpop.permute.xlu0 %2049
          %2053 = vset.pattern.permute.xlu0 0
          %2054 = vperm.xlu0 %2053, %v1894
          %v2055 = vpop.permute.xlu0 %2054
          %2058 = vset.pattern.permute.xlu0 0
          %2059 = vperm.xlu0 %2058, %v1895
          %v2060 = vpop.permute.xlu0 %2059
          %2063 = vset.pattern.permute.xlu0 0
          %2064 = vperm.xlu0 %2063, %v1896
          %v2065 = vpop.permute.xlu0 %2064
          %2068 = vset.pattern.permute.xlu0 0
          %2069 = vperm.xlu0 %2068, %v1897
          %v2070 = vpop.permute.xlu0 %2069
          %2073 = vset.pattern.permute.xlu0 0
          %2074 = vperm.xlu0 %2073, %v1898
          %v2075 = vpop.permute.xlu0 %2074
          %2078 = vset.pattern.permute.xlu0 0
          %2079 = vperm.xlu0 %2078, %v1899
          %v2080 = vpop.permute.xlu0 %2079
          %2083 = vset.pattern.permute.xlu0 0
          %2084 = vperm.xlu0 %2083, %v1900
          %v2085 = vpop.permute.xlu0 %2084
          %2088 = vset.pattern.permute.xlu0 0
          %2089 = vperm.xlu0 %2088, %v1901
          %v2090 = vpop.permute.xlu0 %2089
          %v2092 = vmul.f32 %v1788, %v1905
          %v2093 = vmul.f32 %v1789, %v1905
          %v2094 = vmul.f32 %v1790, %v1910
          %v2095 = vmul.f32 %v1791, %v1910
          %v2096 = vmul.f32 %v1792, %v1915
          %v2097 = vmul.f32 %v1793, %v1915
          %v2098 = vmul.f32 %v1794, %v1920
          %v2099 = vmul.f32 %v1795, %v1920
          %v2100 = vmul.f32 %v1796, %v1925
          %v2101 = vmul.f32 %v1797, %v1925
          %v2102 = vmul.f32 %v1798, %v1930
          %v2103 = vmul.f32 %v1799, %v1930
          %v2104 = vmul.f32 %v1800, %v1935
          %v2105 = vmul.f32 %v1801, %v1935
          %v2106 = vmul.f32 %v1802, %v1940
          %v2107 = vmul.f32 %v1803, %v1940
          %v2108 = vmul.f32 %v1804, %v1945
          %v2109 = vmul.f32 %v1805, %v1945
          %v2110 = vmul.f32 %v1806, %v1950
          %v2111 = vmul.f32 %v1807, %v1950
          %v2112 = vmul.f32 %v1808, %v1955
          %v2113 = vmul.f32 %v1809, %v1955
          %v2114 = vmul.f32 %v1810, %v1960
          %v2115 = vmul.f32 %v1811, %v1960
          %v2116 = vmul.f32 %v1812, %v1965
          %v2117 = vmul.f32 %v1813, %v1965
          %v2118 = vmul.f32 %v1814, %v1970
          %v2119 = vmul.f32 %v1815, %v1970
          %v2120 = vmul.f32 %v1816, %v1975
          %v2121 = vmul.f32 %v1817, %v1975
          %v2122 = vmul.f32 %v1818, %v1980
          %v2123 = vmul.f32 %v1819, %v1980
          %v2124 = vmul.f32 %v1820, %v1985
          %v2125 = vmul.f32 %v1821, %v1985
          %v2126 = vmul.f32 %v1822, %v1990
          %v2127 = vmul.f32 %v1823, %v1990
          %v2128 = vmul.f32 %v1824, %v1995
          %v2129 = vmul.f32 %v1825, %v1995
          %v2130 = vmul.f32 %v1826, %v2000
          %v2131 = vmul.f32 %v1827, %v2000
          %v2132 = vmul.f32 %v1828, %v2005
          %v2133 = vmul.f32 %v1829, %v2005
          %v2134 = vmul.f32 %v1830, %v2010
          %v2135 = vmul.f32 %v1831, %v2010
          %v2136 = vmul.f32 %v1832, %v2015
          %v2137 = vmul.f32 %v1833, %v2015
          %v2138 = vmul.f32 %v1834, %v2020
          %v2139 = vmul.f32 %v1835, %v2020
          %v2140 = vmul.f32 %v1836, %v2025
          %v2141 = vmul.f32 %v1837, %v2025
          %v2142 = vmul.f32 %v1838, %v2030
          %v2143 = vmul.f32 %v1839, %v2030
          %v2144 = vmul.f32 %v1840, %v2035
          %v2145 = vmul.f32 %v1841, %v2035
          %v2146 = vmul.f32 %v1842, %v2040
          %v2147 = vmul.f32 %v1843, %v2040
          %v2148 = vmul.f32 %v1844, %v2045
          %v2149 = vmul.f32 %v1845, %v2045
          %v2150 = vmul.f32 %v1846, %v2050
          %v2151 = vmul.f32 %v1847, %v2050
          %v2152 = vmul.f32 %v1848, %v2055
          %v2153 = vmul.f32 %v1849, %v2055
          %v2154 = vmul.f32 %v1850, %v2060
          %v2155 = vmul.f32 %v1851, %v2060
          %v2156 = vmul.f32 %v1852, %v2065
          %v2157 = vmul.f32 %v1853, %v2065
          %v2158 = vmul.f32 %v1854, %v2070
          %v2159 = vmul.f32 %v1855, %v2070
          %v2160 = vmul.f32 %v1856, %v2075
          %v2161 = vmul.f32 %v1857, %v2075
          %v2162 = vmul.f32 %v1858, %v2080
          %v2163 = vmul.f32 %v1859, %v2080
          %v2164 = vmul.f32 %v1860, %v2085
          %v2165 = vmul.f32 %v1861, %v2085
          %v2166 = vmul.f32 %v1862, %v2090
          %v2167 = vmul.f32 %v1863, %v2090
          %2168 = vst [vmem:[%s263] sm:$0xff] %v2092
          %2169 = vst [vmem:[%s263 + $0x8] sm:$0xff] %v2093
          %2170 = vst [vmem:[%s263 + $0x10] sm:$0xff] %v2094
          %2171 = vst [vmem:[%s263 + $0x18] sm:$0xff] %v2095
          %2172 = vst [vmem:[%s263 + $0x20] sm:$0xff] %v2096
          %2173 = vst [vmem:[%s263 + $0x28] sm:$0xff] %v2097
          %2174 = vst [vmem:[%s263 + $0x30] sm:$0xff] %v2098
          %2175 = vst [vmem:[%s263 + $0x38] sm:$0xff] %v2099
          %2176 = vst [vmem:[%s263 + $0x40] sm:$0xff] %v2100
          %2177 = vst [vmem:[%s263 + $0x48] sm:$0xff] %v2101
          %2178 = vst [vmem:[%s263 + $0x50] sm:$0xff] %v2102
          %2179 = vst [vmem:[%s263 + $0x58] sm:$0xff] %v2103
          %2180 = vst [vmem:[%s263 + $0x60] sm:$0xff] %v2104
          %2181 = vst [vmem:[%s263 + $0x68] sm:$0xff] %v2105
          %2182 = vst [vmem:[%s263 + $0x70] sm:$0xff] %v2106
          %2183 = vst [vmem:[%s263 + $0x78] sm:$0xff] %v2107
          %2184 = vst [vmem:[%s263 + $0x80] sm:$0xff] %v2108
          %2185 = vst [vmem:[%s263 + $0x88] sm:$0xff] %v2109
          %2186 = vst [vmem:[%s263 + $0x90] sm:$0xff] %v2110
          %2187 = vst [vmem:[%s263 + $0x98] sm:$0xff] %v2111
          %2188 = vst [vmem:[%s263 + $0xa0] sm:$0xff] %v2112
          %2189 = vst [vmem:[%s263 + $0xa8] sm:$0xff] %v2113
          %2190 = vst [vmem:[%s263 + $0xb0] sm:$0xff] %v2114
          %2191 = vst [vmem:[%s263 + $0xb8] sm:$0xff] %v2115
          %2192 = vst [vmem:[%s263 + $0xc0] sm:$0xff] %v2116
          %2193 = vst [vmem:[%s263 + $0xc8] sm:$0xff] %v2117
          %2194 = vst [vmem:[%s263 + $0xd0] sm:$0xff] %v2118
          %2195 = vst [vmem:[%s263 + $0xd8] sm:$0xff] %v2119
          %2196 = vst [vmem:[%s263 + $0xe0] sm:$0xff] %v2120
          %2197 = vst [vmem:[%s263 + $0xe8] sm:$0xff] %v2121
          %2198 = vst [vmem:[%s263 + $0xf0] sm:$0xff] %v2122
          %2199 = vst [vmem:[%s263 + $0xf8] sm:$0xff] %v2123
          %2200 = vst [vmem:[%s263 + $0x100] sm:$0xff] %v2124
          %2201 = vst [vmem:[%s263 + $0x108] sm:$0xff] %v2125
          %2202 = vst [vmem:[%s263 + $0x110] sm:$0xff] %v2126
          %2203 = vst [vmem:[%s263 + $0x118] sm:$0xff] %v2127
          %2204 = vst [vmem:[%s263 + $0x120] sm:$0xff] %v2128
          %2205 = vst [vmem:[%s263 + $0x128] sm:$0xff] %v2129
          %2206 = vst [vmem:[%s263 + $0x130] sm:$0xff] %v2130
          %2207 = vst [vmem:[%s263 + $0x138] sm:$0xff] %v2131
          %2208 = vst [vmem:[%s263 + $0x140] sm:$0xff] %v2132
          %2209 = vst [vmem:[%s263 + $0x148] sm:$0xff] %v2133
          %2210 = vst [vmem:[%s263 + $0x150] sm:$0xff] %v2134
          %2211 = vst [vmem:[%s263 + $0x158] sm:$0xff] %v2135
          %2212 = vst [vmem:[%s263 + $0x160] sm:$0xff] %v2136
          %2213 = vst [vmem:[%s263 + $0x168] sm:$0xff] %v2137
          %2214 = vst [vmem:[%s263 + $0x170] sm:$0xff] %v2138
          %2215 = vst [vmem:[%s263 + $0x178] sm:$0xff] %v2139
          %2216 = vst [vmem:[%s263 + $0x180] sm:$0xff] %v2140
          %2217 = vst [vmem:[%s263 + $0x188] sm:$0xff] %v2141
          %2218 = vst [vmem:[%s263 + $0x190] sm:$0xff] %v2142
          %2219 = vst [vmem:[%s263 + $0x198] sm:$0xff] %v2143
          %2220 = vst [vmem:[%s263 + $0x1a0] sm:$0xff] %v2144
          %2221 = vst [vmem:[%s263 + $0x1a8] sm:$0xff] %v2145
          %2222 = vst [vmem:[%s263 + $0x1b0] sm:$0xff] %v2146
          %2223 = vst [vmem:[%s263 + $0x1b8] sm:$0xff] %v2147
          %2224 = vst [vmem:[%s263 + $0x1c0] sm:$0xff] %v2148
          %2225 = vst [vmem:[%s263 + $0x1c8] sm:$0xff] %v2149
          %2226 = vst [vmem:[%s263 + $0x1d0] sm:$0xff] %v2150
          %2227 = vst [vmem:[%s263 + $0x1d8] sm:$0xff] %v2151
          %2228 = vst [vmem:[%s263 + $0x1e0] sm:$0xff] %v2152
          %2229 = vst [vmem:[%s263 + $0x1e8] sm:$0xff] %v2153
          %2230 = vst [vmem:[%s263 + $0x1f0] sm:$0xff] %v2154
          %2231 = vst [vmem:[%s263 + $0x1f8] sm:$0xff] %v2155
          %2232 = vst [vmem:[%s263 + $0x200] sm:$0xff] %v2156
          %2233 = vst [vmem:[%s263 + $0x208] sm:$0xff] %v2157
          %2234 = vst [vmem:[%s263 + $0x210] sm:$0xff] %v2158
          %2235 = vst [vmem:[%s263 + $0x218] sm:$0xff] %v2159
          %2236 = vst [vmem:[%s263 + $0x220] sm:$0xff] %v2160
          %2237 = vst [vmem:[%s263 + $0x228] sm:$0xff] %v2161
          %2238 = vst [vmem:[%s263 + $0x230] sm:$0xff] %v2162
          %2239 = vst [vmem:[%s263 + $0x238] sm:$0xff] %v2163
          %2240 = vst [vmem:[%s263 + $0x240] sm:$0xff] %v2164
          %2241 = vst [vmem:[%s263 + $0x248] sm:$0xff] %v2165
          %2242 = vst [vmem:[%s263 + $0x250] sm:$0xff] %v2166
          %2243 = vst [vmem:[%s263 + $0x258] sm:$0xff] %v2167
        $region48: #{tpu_custom_call.1} parent=35 // pred_fallthru
          _
        %s2244 = sand.u32 %s132, 1
        %s2245 = scalar_lea.sflag [#allocation6], %s2244
        %s2246 = sand.u32 %s132, 1
        %s2247 = smul.addr %s2246, 608
        %s2248 = scalar_lea.vmem [#allocation7], %s2247
        // Predicated region
        $region49: #{tpu_custom_call.1} parent=35 // pred_check
          %p2249 = pneg %p142
        $region50: #{tpu_custom_call.1} parent=35 // pred_check_branch
          %2251 = sbr.rel (%p2249) target = $region52
        $region51: #{tpu_custom_call.1} parent=35 // pred_region
          %s2252 = smul.u32 38, %s30
          %s2253 = ssub.s32 75, %s2252
          %p2254 = scmp.lt.s32.totalorder %s2253, 38
          %s2255 = scalar_select %p2254, %s2253, 38
          %s2256 = smul.u32 8, %s2255
          %s2257 = smul.u32 %s2256, 2
          %s2258 = ssub.s32 608, %s2257
          %s2259 = sshll.u32 %s2258, 4
          %2260 = vsyncadd %s2245, %s2259
          %p2261 = scmp.ne.s32.totalorder 0, %s2257
          %s2262 = smul.addr %s2252, 2
          %s2263 = smul.addr %s2262, 8
          %s2264 = scalar_lea.hbm %s5, %s2263
          %s2265 = smul.u32 16, %s2255
          %s2266 = sshll.u32 %s2248, 4
          %s2267 = int_to_ptr.vmem [resolvable:$true] %s2266
          %s2268 = sshll.u32 %s2264, 4
          %s2269 = int_to_ptr.hbm [resolvable:$true] %s2268
          %s2270 = sshll.u32 %s2265, 4
          %2274 = dma.vmem_to_hbm [thread:$0]  (%p2261), %s2267, %s2270, %s2269, %s2245, 256, 256, 16
        $region52: #{tpu_custom_call.1} parent=35 // pred_fallthru
          _
      $region36: #{tpu_custom_call.1} parent=5 // pred_fallthru
        _
      %p2275 = scmp.le.s32.totalorder 2, %s25
      // Predicated region
      $region53: #{tpu_custom_call.1} parent=5 // pred_check
        %p2276 = pneg %p2275
      $region54: #{tpu_custom_call.1} parent=5 // pred_check_branch
        %2278 = sbr.rel (%p2276) target = $region56
      $region55: #{tpu_custom_call.1} parent=5 // pred_region
        %s2279 = ssub.s32 %s25, 2
        // Predicated region
        $region57: #{tpu_custom_call.1} parent=55 // pred_check
          %p2280 = pneg %p148
        $region58: #{tpu_custom_call.1} parent=55 // pred_check_branch
          %2282 = sbr.rel (%p2280) target = $region60
        $region59: #{tpu_custom_call.1} parent=55 // pred_region
          %s2283 = sand.u32 %s133, 1
          %s2284 = scalar_lea.sflag [#allocation6], %s2283
          %s2285 = sand.u32 %s133, 1
          %s2286 = smul.addr %s2285, 608
          %s2287 = scalar_lea.vmem [#allocation7], %s2286
          %2289 = dma.done %s2284, 9728
        $region60: #{tpu_custom_call.1} parent=55 // pred_fallthru
          _
      $region56: #{tpu_custom_call.1} parent=5 // pred_fallthru
        _
    $region6: #{tpu_custom_call.1} parent=1 // loop_footer
      %s29 = sadd.s32 1, %s25
    $region7: #{tpu_custom_call.1} parent=1 // loop_footer_branch
      %24 = sbr.rel target = $region3
    $region8: #{tpu_custom_call.1} parent=1 // loop_exit
      _
    %2290 = vsyncpa [#allocation5], 1
    %s2291 = scalar_lea.sflag [#allocation5], 1
    %2292 = vsyncpa %s2291, 1
    %2293 = vsyncpa [#allocation6], 1
    %s2294 = scalar_lea.sflag [#allocation6], 1
    %2295 = vsyncpa %s2294, 1

</llo_original>
